<compile_context>
chip_gen: v7x
topology: tpu7x:2x2x1
jax: 0.10.0
libtpu: 0.0.40
codegen_flags: <defaults>
</compile_context>

<pallas_src>
import functools

import numpy as np
import jax
import jax.numpy as jnp
from jax import lax
from jax.experimental import pallas as pl
from jax.experimental.pallas import tpu as pltpu


_NEG_SLOPE = 0.01  # nn.LeakyReLU() default


def _leaky_relu(v):
    return jnp.where(v >= 0, v, _NEG_SLOPE * v)


def _round_up(n, m):
    return (n + m - 1) // m * m


# ---------------------------------------------------------------------------
# FMRB kernel: one grid step == one batch element, full plane resident in VMEM
# ---------------------------------------------------------------------------
def _fmrb_kernel(x_ref, w1_ref, b1_ref, wc_ref, bc_ref, w3_ref, b3_ref,
                 o_ref, src_ref, col_ref, *, H, W, lrelu_in):
    C2 = src_ref.shape[0]            # padded 2*in_feature
    Wp = W + 4                       # padded plane width (pad = 2 per side)
    Np = (H + 4) * Wp                # flattened padded-plane size
    M = 2 * Wp + 2                   # margin so every tap slice stays in bounds

    x = x_ref[0]                     # (C, H*W), lane-dense
    if lrelu_in:                     # ERB's inter-block LeakyReLU fused into FMRB2
        x = _leaky_relu(x)

    # ---- Conv1: 1x1, C -> 2C, bias, LeakyReLU (single MXU matmul over the plane) ----
    out1 = jnp.dot(w1_ref[...], x, preferred_element_type=jnp.float32) + b1_ref[...]
    out1 = _leaky_relu(out1)         # (2C, H*W)

    # ---- Embed out1 once into a flat zero-padded plane (shared by 3x3 and 5x5) ----
    src_ref[...] = jnp.zeros_like(src_ref)
    for h in range(H):               # static row copies; no boundary masking anywhere
        d0 = M + (h + 2) * Wp + 2
        src_ref[:, d0:d0 + W] = out1[:, h * W:(h + 1) * W]

    # ---- Fused Conv2_1 (3x3) + Conv2_2 (5x5): 25 shared shifted taps, ONE matmul ----
    t = 0
    for kh in range(5):
        for kw in range(5):
            s0 = M + (kh - 2) * Wp + (kw - 2)
            col_ref[t * C2:(t + 1) * C2, :] = src_ref[:, s0:s0 + Np]
            t += 1
    out2 = jnp.dot(wc_ref[...], col_ref[...],
                   preferred_element_type=jnp.float32) + bc_ref[...]
    out2 = _leaky_relu(out2)         # (2C, Np); padding-ring columns are never read back

    # ---- out3 = out1 + out2 on the padded grid (src interior == out1) ----
    out3 = src_ref[:, M:M + Np] + out2

    # ---- Conv3: 1x1, 2C -> C, bias, LeakyReLU ----
    out4 = jnp.dot(w3_ref[...], out3, preferred_element_type=jnp.float32) + b3_ref[...]
    out4 = _leaky_relu(out4)         # (C, Np)

    # ---- Residual with the block input; write interior rows to the lane-dense output ----
    for h in range(H):
        q0 = (h + 2) * Wp + 2
        o_ref[0, :, h * W:(h + 1) * W] = (
            x[:, h * W:(h + 1) * W] + out4[:, q0:q0 + W]).astype(o_ref.dtype)


def _fmrb_call(x_flat, w1, b1, wc, bc, w3, b3, *, H, W, lrelu_in):
    """x_flat: (B, Cp, H*W); weights already merged/padded by _prepare_fmrb."""
    B, Cp, HW = x_flat.shape
    C2p = w1.shape[0]
    Wp = W + 4
    Np = (H + 4) * Wp
    M = 2 * Wp + 2
    Ns = Np + 2 * M

    kernel = functools.partial(_fmrb_kernel, H=H, W=W, lrelu_in=lrelu_in)
    return pl.pallas_call(
        kernel,
        out_shape=jax.ShapeDtypeStruct((B, Cp, HW), x_flat.dtype),
        grid_spec=pltpu.PrefetchScalarGridSpec(
            num_scalar_prefetch=0,
            grid=(B,),
            in_specs=[
                pl.BlockSpec((1, Cp, HW), lambda b: (b, 0, 0)),
                # constant index_maps -> weights/biases are brought to VMEM once
                pl.BlockSpec((C2p, Cp), lambda b: (0, 0)),
                pl.BlockSpec((C2p, 1), lambda b: (0, 0)),
                pl.BlockSpec((C2p, 25 * C2p), lambda b: (0, 0)),
                pl.BlockSpec((C2p, 1), lambda b: (0, 0)),
                pl.BlockSpec((Cp, C2p), lambda b: (0, 0)),
                pl.BlockSpec((Cp, 1), lambda b: (0, 0)),
            ],
            out_specs=pl.BlockSpec((1, Cp, HW), lambda b: (b, 0, 0)),
            scratch_shapes=[
                pltpu.VMEM((C2p, Ns), jnp.float32),        # zero-padded out1 plane
                pltpu.VMEM((25 * C2p, Np), jnp.float32),   # im2col slab (25 shared taps)
            ],
        ),
        compiler_params=pltpu.CompilerParams(
            dimension_semantics=("parallel",)),
    )(x_flat, w1, b1, wc, bc, w3, b3)


# ---------------------------------------------------------------------------
# Host-side parameter preparation: merge 3x3 into the 5x5 tap grid, flatten for
# the im2col matmul, pad channels to multiples of 8.
# ---------------------------------------------------------------------------
def _prepare_fmrb(p, c_pad):
    c2, c = p['w1'].shape[0], p['w1'].shape[1]
    c2_pad = _round_up(c2, 8)

    wc = p['w2_2'].astype(jnp.float32)
    wc = wc.at[:, :, 1:4, 1:4].add(p['w2_1'].astype(jnp.float32))          # merge 3x3
    wc = jnp.pad(wc, ((0, c2_pad - c2), (0, c2_pad - c2), (0, 0), (0, 0)))
    # column order must match the im2col slab: row index = (kh*5 + kw)*C2 + ci
    wc_flat = jnp.transpose(wc, (0, 2, 3, 1)).reshape(c2_pad, 25 * c2_pad)

    w1 = jnp.pad(p['w1'].reshape(c2, c), ((0, c2_pad - c2), (0, c_pad - c)))
    b1 = jnp.pad(p['b1'], (0, c2_pad - c2)).reshape(c2_pad, 1)
    bc = jnp.pad(p['b2_1'] + p['b2_2'], (0, c2_pad - c2)).reshape(c2_pad, 1)
    w3 = jnp.pad(p['w3'].reshape(c, c2), ((0, c_pad - c), (0, c2_pad - c2)))
    b3 = jnp.pad(p['b3'], (0, c_pad - c)).reshape(c_pad, 1)
    return w1, b1, wc_flat, bc, w3, b3


def erb_forward(x, p1, p2):
    """ERB forward: x (B, C, H, W) f32 -> (B, C, H, W)."""
    B, C, H, W = x.shape
    Cp = _round_up(C, 8)
    xf = x.reshape(B, C, H * W)
    if Cp != C:
        xf = jnp.pad(xf, ((0, 0), (0, Cp - C), (0, 0)))   # zero channels stay zero
    y = _fmrb_call(xf, *_prepare_fmrb(p1, Cp), H=H, W=W, lrelu_in=False)   # FMRB1
    y = _fmrb_call(y, *_prepare_fmrb(p2, Cp), H=H, W=W, lrelu_in=True)     # LRelu + FMRB2
    return y[:, :C, :].reshape(B, C, H, W)


# ---------------------------------------------------------------------------
# Plain-JAX reference (mirrors the PyTorch module) and deterministic init
# ---------------------------------------------------------------------------
def _conv_ref(x, w, b, pad):
    dn = lax.conv_dimension_numbers(x.shape, w.shape, ('NCHW', 'OIHW', 'NCHW'))
    y = lax.conv_general_dilated(x, w, (1, 1), ((pad, pad), (pad, pad)),
                                 dimension_numbers=dn,
                                 precision=lax.Precision.HIGHEST)
    return y + b[None, :, None, None]


def _fmrb_ref(x, p):
    out1 = _leaky_relu(_conv_ref(x, p['w1'], p['b1'], 0))
    out2 = _leaky_relu(_conv_ref(out1, p['w2_1'], p['b2_1'], 1)
                       + _conv_ref(out1, p['w2_2'], p['b2_2'], 2))
    out3 = out1 + out2
    out4 = _leaky_relu(_conv_ref(out3, p['w3'], p['b3'], 0))
    return x + out4


def _erb_ref(x, p1, p2):
    return _fmrb_ref(_leaky_relu(_fmrb_ref(x, p1)), p2)


def _init_conv(key, cout, cin, k):
    kw, kb = jax.random.split(key)
    bound = 1.0 / float(np.sqrt(cin * k * k))
    w = jax.random.uniform(kw, (cout, cin, k, k), jnp.float32, -bound, bound)
    b = jax.random.uniform(kb, (cout,), jnp.float32, -bound, bound)
    return w, b


def _init_fmrb(key, c):
    k1, k2, k3, k4 = jax.random.split(key, 4)
    w1, b1 = _init_conv(k1, 2 * c, c, 1)
    w21, b21 = _init_conv(k2, 2 * c, 2 * c, 3)
    w22, b22 = _init_conv(k3, 2 * c, 2 * c, 5)
    w3, b3 = _init_conv(k4, c, 2 * c, 1)
    return dict(w1=w1, b1=b1, w2_1=w21, b2_1=b21, w2_2=w22, b2_2=b22, w3=w3, b3=b3)


if __name__ == "__main__":
    B, C, H, W = 2, 4, 16, 16                        # in_feature = 4

    root = jax.random.PRNGKey(0)
    kx, k1, k2 = jax.random.split(root, 3)
    x = jax.random.normal(kx, (B, C, H, W), dtype=jnp.float32)
    p1 = _init_fmrb(k1, C)
    p2 = _init_fmrb(k2, C)

    out = jax.block_until_ready(erb_forward(x, p1, p2))
    ref = jax.block_until_ready(_erb_ref(x, p1, p2))

    np.testing.assert_allclose(np.asarray(out), np.asarray(ref), rtol=1e-2, atol=1e-2)
    print("KERNEL_OK")
</pallas_src>

<mosaic_0001>
module attributes {stable_mosaic.version = 11 : i64} {
  func.func @_fmrb_kernel(%arg0: i32, %arg1: memref<1x8x256xf32, #tpu.memory_space<vmem>>, %arg2: memref<8x8xf32, #tpu.memory_space<vmem>>, %arg3: memref<8x1xf32, #tpu.memory_space<vmem>>, %arg4: memref<8x200xf32, #tpu.memory_space<vmem>>, %arg5: memref<8x1xf32, #tpu.memory_space<vmem>>, %arg6: memref<8x8xf32, #tpu.memory_space<vmem>>, %arg7: memref<8x1xf32, #tpu.memory_space<vmem>>, %arg8: memref<1x8x256xf32, #tpu.memory_space<vmem>>, %arg9: memref<8x484xf32, #tpu.memory_space<vmem>>, %arg10: memref<200x400xf32, #tpu.memory_space<vmem>>) attributes {dimension_semantics = [#tpu.dimension_semantics<parallel>], iteration_bounds = array<i64: 2>, scalar_prefetch = 0 : i64, scratch_operands = 2 : i64, tpu.core_type = #tpu.core_type<tc>, window_params = [{transform_indices = @transform_0, window_bounds = array<i64: 1, 8, 256>}, {pipeline_mode = #tpu.pipeline_mode<synchronous>, transform_indices = @transform_1, window_bounds = array<i64: 8, 8>}, {pipeline_mode = #tpu.pipeline_mode<synchronous>, transform_indices = @transform_2, window_bounds = array<i64: 8, 1>}, {pipeline_mode = #tpu.pipeline_mode<synchronous>, transform_indices = @transform_3, window_bounds = array<i64: 8, 200>}, {pipeline_mode = #tpu.pipeline_mode<synchronous>, transform_indices = @transform_4, window_bounds = array<i64: 8, 1>}, {pipeline_mode = #tpu.pipeline_mode<synchronous>, transform_indices = @transform_5, window_bounds = array<i64: 8, 8>}, {pipeline_mode = #tpu.pipeline_mode<synchronous>, transform_indices = @transform_6, window_bounds = array<i64: 8, 1>}, {transform_indices = @transform_7, window_bounds = array<i64: 1, 8, 256>}]} {
    %c0 = arith.constant 0 : index
    %c0_0 = arith.constant 0 : index
    %c0_1 = arith.constant 0 : index
    %0 = vector.load %arg1[%c0, %c0_0, %c0_1] : memref<1x8x256xf32, #tpu.memory_space<vmem>>, vector<1x8x256xf32>
    %1 = vector.shape_cast %0 : vector<1x8x256xf32> to vector<8x256xf32>
    %c0_2 = arith.constant 0 : index
    %c0_3 = arith.constant 0 : index
    %2 = vector.load %arg2[%c0_2, %c0_3] : memref<8x8xf32, #tpu.memory_space<vmem>>, vector<8x8xf32>
    %cst = arith.constant dense<0.000000e+00> : vector<8x256xf32>
    %3 = tpu.matmul %2, %1, %cst {dimension_numbers = #tpu.dot_dimension_numbers<[1], [0], [0], [1], [0, 0, 1, 1], [], []>} : vector<8x8xf32>, vector<8x256xf32>, vector<8x256xf32> -> vector<8x256xf32>
    %c0_4 = arith.constant 0 : index
    %c0_5 = arith.constant 0 : index
    %4 = vector.load %arg3[%c0_4, %c0_5] : memref<8x1xf32, #tpu.memory_space<vmem>>, vector<8x1xf32>
    %5 = vector.broadcast %4 : vector<8x1xf32> to vector<8x256xf32>
    %6 = arith.addf %3, %5 : vector<8x256xf32>
    %cst_6 = arith.constant 0.000000e+00 : f32
    %7 = vector.broadcast %cst_6 : f32 to vector<8x256xf32>
    %8 = arith.cmpf oge, %6, %7 : vector<8x256xf32>
    %cst_7 = arith.constant 0.00999999977 : f32
    %9 = vector.broadcast %cst_7 : f32 to vector<8x256xf32>
    %10 = arith.mulf %9, %6 : vector<8x256xf32>
    %11 = arith.select %8, %6, %10 : vector<8x256xi1>, vector<8x256xf32>
    %cst_8 = arith.constant 0.000000e+00 : f32
    %12 = vector.broadcast %cst_8 : f32 to vector<8x484xf32>
    %c0_9 = arith.constant 0 : index
    %c0_10 = arith.constant 0 : index
    %13 = vector.load %arg9[%c0_9, %c0_10] : memref<8x484xf32, #tpu.memory_space<vmem>>, vector<8x484xf32>
    tpu.vector_store %arg9[%c0_9, %c0_10], %12 {strides = array<i32>} : memref<8x484xf32, #tpu.memory_space<vmem>>, vector<8x484xf32>,
    %14 = vector.extract_strided_slice %11 {offsets = [0, 0], sizes = [8, 16], strides = [1, 1]} : vector<8x256xf32> to vector<8x16xf32>
    %c0_11 = arith.constant 0 : index
    %c84 = arith.constant 84 : index
    %15 = vector.load %arg9[%c0_11, %c84] : memref<8x484xf32, #tpu.memory_space<vmem>>, vector<8x16xf32>
    tpu.vector_store %arg9[%c0_11, %c84], %14 {strides = array<i32>} : memref<8x484xf32, #tpu.memory_space<vmem>>, vector<8x16xf32>,
    %16 = vector.extract_strided_slice %11 {offsets = [0, 16], sizes = [8, 16], strides = [1, 1]} : vector<8x256xf32> to vector<8x16xf32>
    %c0_12 = arith.constant 0 : index
    %c104 = arith.constant 104 : index
    %17 = vector.load %arg9[%c0_12, %c104] : memref<8x484xf32, #tpu.memory_space<vmem>>, vector<8x16xf32>
    tpu.vector_store %arg9[%c0_12, %c104], %16 {strides = array<i32>} : memref<8x484xf32, #tpu.memory_space<vmem>>, vector<8x16xf32>,
    %18 = vector.extract_strided_slice %11 {offsets = [0, 32], sizes = [8, 16], strides = [1, 1]} : vector<8x256xf32> to vector<8x16xf32>
    %c0_13 = arith.constant 0 : index
    %c124 = arith.constant 124 : index
    %19 = vector.load %arg9[%c0_13, %c124] : memref<8x484xf32, #tpu.memory_space<vmem>>, vector<8x16xf32>
    tpu.vector_store %arg9[%c0_13, %c124], %18 {strides = array<i32>} : memref<8x484xf32, #tpu.memory_space<vmem>>, vector<8x16xf32>,
    %20 = vector.extract_strided_slice %11 {offsets = [0, 48], sizes = [8, 16], strides = [1, 1]} : vector<8x256xf32> to vector<8x16xf32>
    %c0_14 = arith.constant 0 : index
    %c144 = arith.constant 144 : index
    %21 = vector.load %arg9[%c0_14, %c144] : memref<8x484xf32, #tpu.memory_space<vmem>>, vector<8x16xf32>
    tpu.vector_store %arg9[%c0_14, %c144], %20 {strides = array<i32>} : memref<8x484xf32, #tpu.memory_space<vmem>>, vector<8x16xf32>,
    %22 = vector.extract_strided_slice %11 {offsets = [0, 64], sizes = [8, 16], strides = [1, 1]} : vector<8x256xf32> to vector<8x16xf32>
    %c0_15 = arith.constant 0 : index
    %c164 = arith.constant 164 : index
    %23 = vector.load %arg9[%c0_15, %c164] : memref<8x484xf32, #tpu.memory_space<vmem>>, vector<8x16xf32>
    tpu.vector_store %arg9[%c0_15, %c164], %22 {strides = array<i32>} : memref<8x484xf32, #tpu.memory_space<vmem>>, vector<8x16xf32>,
    %24 = vector.extract_strided_slice %11 {offsets = [0, 80], sizes = [8, 16], strides = [1, 1]} : vector<8x256xf32> to vector<8x16xf32>
    %c0_16 = arith.constant 0 : index
    %c184 = arith.constant 184 : index
    %25 = vector.load %arg9[%c0_16, %c184] : memref<8x484xf32, #tpu.memory_space<vmem>>, vector<8x16xf32>
    tpu.vector_store %arg9[%c0_16, %c184], %24 {strides = array<i32>} : memref<8x484xf32, #tpu.memory_space<vmem>>, vector<8x16xf32>,
    %26 = vector.extract_strided_slice %11 {offsets = [0, 96], sizes = [8, 16], strides = [1, 1]} : vector<8x256xf32> to vector<8x16xf32>
    %c0_17 = arith.constant 0 : index
    %c204 = arith.constant 204 : index
    %27 = vector.load %arg9[%c0_17, %c204] : memref<8x484xf32, #tpu.memory_space<vmem>>, vector<8x16xf32>
    tpu.vector_store %arg9[%c0_17, %c204], %26 {strides = array<i32>} : memref<8x484xf32, #tpu.memory_space<vmem>>, vector<8x16xf32>,
    %28 = vector.extract_strided_slice %11 {offsets = [0, 112], sizes = [8, 16], strides = [1, 1]} : vector<8x256xf32> to vector<8x16xf32>
    %c0_18 = arith.constant 0 : index
    %c224 = arith.constant 224 : index
    %29 = vector.load %arg9[%c0_18, %c224] : memref<8x484xf32, #tpu.memory_space<vmem>>, vector<8x16xf32>
    tpu.vector_store %arg9[%c0_18, %c224], %28 {strides = array<i32>} : memref<8x484xf32, #tpu.memory_space<vmem>>, vector<8x16xf32>,
    %30 = vector.extract_strided_slice %11 {offsets = [0, 128], sizes = [8, 16], strides = [1, 1]} : vector<8x256xf32> to vector<8x16xf32>
    %c0_19 = arith.constant 0 : index
    %c244 = arith.constant 244 : index
    %31 = vector.load %arg9[%c0_19, %c244] : memref<8x484xf32, #tpu.memory_space<vmem>>, vector<8x16xf32>
    tpu.vector_store %arg9[%c0_19, %c244], %30 {strides = array<i32>} : memref<8x484xf32, #tpu.memory_space<vmem>>, vector<8x16xf32>,
    %32 = vector.extract_strided_slice %11 {offsets = [0, 144], sizes = [8, 16], strides = [1, 1]} : vector<8x256xf32> to vector<8x16xf32>
    %c0_20 = arith.constant 0 : index
    %c264 = arith.constant 264 : index
    %33 = vector.load %arg9[%c0_20, %c264] : memref<8x484xf32, #tpu.memory_space<vmem>>, vector<8x16xf32>
    tpu.vector_store %arg9[%c0_20, %c264], %32 {strides = array<i32>} : memref<8x484xf32, #tpu.memory_space<vmem>>, vector<8x16xf32>,
    %34 = vector.extract_strided_slice %11 {offsets = [0, 160], sizes = [8, 16], strides = [1, 1]} : vector<8x256xf32> to vector<8x16xf32>
    %c0_21 = arith.constant 0 : index
    %c284 = arith.constant 284 : index
    %35 = vector.load %arg9[%c0_21, %c284] : memref<8x484xf32, #tpu.memory_space<vmem>>, vector<8x16xf32>
    tpu.vector_store %arg9[%c0_21, %c284], %34 {strides = array<i32>} : memref<8x484xf32, #tpu.memory_space<vmem>>, vector<8x16xf32>,
    %36 = vector.extract_strided_slice %11 {offsets = [0, 176], sizes = [8, 16], strides = [1, 1]} : vector<8x256xf32> to vector<8x16xf32>
    %c0_22 = arith.constant 0 : index
    %c304 = arith.constant 304 : index
    %37 = vector.load %arg9[%c0_22, %c304] : memref<8x484xf32, #tpu.memory_space<vmem>>, vector<8x16xf32>
    tpu.vector_store %arg9[%c0_22, %c304], %36 {strides = array<i32>} : memref<8x484xf32, #tpu.memory_space<vmem>>, vector<8x16xf32>,
    %38 = vector.extract_strided_slice %11 {offsets = [0, 192], sizes = [8, 16], strides = [1, 1]} : vector<8x256xf32> to vector<8x16xf32>
    %c0_23 = arith.constant 0 : index
    %c324 = arith.constant 324 : index
    %39 = vector.load %arg9[%c0_23, %c324] : memref<8x484xf32, #tpu.memory_space<vmem>>, vector<8x16xf32>
    tpu.vector_store %arg9[%c0_23, %c324], %38 {strides = array<i32>} : memref<8x484xf32, #tpu.memory_space<vmem>>, vector<8x16xf32>,
    %40 = vector.extract_strided_slice %11 {offsets = [0, 208], sizes = [8, 16], strides = [1, 1]} : vector<8x256xf32> to vector<8x16xf32>
    %c0_24 = arith.constant 0 : index
    %c344 = arith.constant 344 : index
    %41 = vector.load %arg9[%c0_24, %c344] : memref<8x484xf32, #tpu.memory_space<vmem>>, vector<8x16xf32>
    tpu.vector_store %arg9[%c0_24, %c344], %40 {strides = array<i32>} : memref<8x484xf32, #tpu.memory_space<vmem>>, vector<8x16xf32>,
    %42 = vector.extract_strided_slice %11 {offsets = [0, 224], sizes = [8, 16], strides = [1, 1]} : vector<8x256xf32> to vector<8x16xf32>
    %c0_25 = arith.constant 0 : index
    %c364 = arith.constant 364 : index
    %43 = vector.load %arg9[%c0_25, %c364] : memref<8x484xf32, #tpu.memory_space<vmem>>, vector<8x16xf32>
    tpu.vector_store %arg9[%c0_25, %c364], %42 {strides = array<i32>} : memref<8x484xf32, #tpu.memory_space<vmem>>, vector<8x16xf32>,
    %44 = vector.extract_strided_slice %11 {offsets = [0, 240], sizes = [8, 16], strides = [1, 1]} : vector<8x256xf32> to vector<8x16xf32>
    %c0_26 = arith.constant 0 : index
    %c384 = arith.constant 384 : index
    %45 = vector.load %arg9[%c0_26, %c384] : memref<8x484xf32, #tpu.memory_space<vmem>>, vector<8x16xf32>
    tpu.vector_store %arg9[%c0_26, %c384], %44 {strides = array<i32>} : memref<8x484xf32, #tpu.memory_space<vmem>>, vector<8x16xf32>,
    %c0_27 = arith.constant 0 : index
    %c0_28 = arith.constant 0 : index
    %46 = vector.load %arg9[%c0_27, %c0_28] : memref<8x484xf32, #tpu.memory_space<vmem>>, vector<8x400xf32>
    %c0_29 = arith.constant 0 : index
    %c0_30 = arith.constant 0 : index
    %47 = vector.load %arg10[%c0_29, %c0_30] : memref<200x400xf32, #tpu.memory_space<vmem>>, vector<8x400xf32>
    tpu.vector_store %arg10[%c0_29, %c0_30], %46 {strides = array<i32>} : memref<200x400xf32, #tpu.memory_space<vmem>>, vector<8x400xf32>,
    %c0_31 = arith.constant 0 : index
    %c1 = arith.constant 1 : index
    %48 = vector.load %arg9[%c0_31, %c1] : memref<8x484xf32, #tpu.memory_space<vmem>>, vector<8x400xf32>
    %c8 = arith.constant 8 : index
    %c0_32 = arith.constant 0 : index
    %49 = vector.load %arg10[%c8, %c0_32] : memref<200x400xf32, #tpu.memory_space<vmem>>, vector<8x400xf32>
    tpu.vector_store %arg10[%c8, %c0_32], %48 {strides = array<i32>} : memref<200x400xf32, #tpu.memory_space<vmem>>, vector<8x400xf32>,
    %c0_33 = arith.constant 0 : index
    %c2 = arith.constant 2 : index
    %50 = vector.load %arg9[%c0_33, %c2] : memref<8x484xf32, #tpu.memory_space<vmem>>, vector<8x400xf32>
    %c16 = arith.constant 16 : index
    %c0_34 = arith.constant 0 : index
    %51 = vector.load %arg10[%c16, %c0_34] : memref<200x400xf32, #tpu.memory_space<vmem>>, vector<8x400xf32>
    tpu.vector_store %arg10[%c16, %c0_34], %50 {strides = array<i32>} : memref<200x400xf32, #tpu.memory_space<vmem>>, vector<8x400xf32>,
    %c0_35 = arith.constant 0 : index
    %c3 = arith.constant 3 : index
    %52 = vector.load %arg9[%c0_35, %c3] : memref<8x484xf32, #tpu.memory_space<vmem>>, vector<8x400xf32>
    %c24 = arith.constant 24 : index
    %c0_36 = arith.constant 0 : index
    %53 = vector.load %arg10[%c24, %c0_36] : memref<200x400xf32, #tpu.memory_space<vmem>>, vector<8x400xf32>
    tpu.vector_store %arg10[%c24, %c0_36], %52 {strides = array<i32>} : memref<200x400xf32, #tpu.memory_space<vmem>>, vector<8x400xf32>,
    %c0_37 = arith.constant 0 : index
    %c4 = arith.constant 4 : index
    %54 = vector.load %arg9[%c0_37, %c4] : memref<8x484xf32, #tpu.memory_space<vmem>>, vector<8x400xf32>
    %c32 = arith.constant 32 : index
    %c0_38 = arith.constant 0 : index
    %55 = vector.load %arg10[%c32, %c0_38] : memref<200x400xf32, #tpu.memory_space<vmem>>, vector<8x400xf32>
    tpu.vector_store %arg10[%c32, %c0_38], %54 {strides = array<i32>} : memref<200x400xf32, #tpu.memory_space<vmem>>, vector<8x400xf32>,
    %c0_39 = arith.constant 0 : index
    %c20 = arith.constant 20 : index
    %56 = vector.load %arg9[%c0_39, %c20] : memref<8x484xf32, #tpu.memory_space<vmem>>, vector<8x400xf32>
    %c40 = arith.constant 40 : index
    %c0_40 = arith.constant 0 : index
    %57 = vector.load %arg10[%c40, %c0_40] : memref<200x400xf32, #tpu.memory_space<vmem>>, vector<8x400xf32>
    tpu.vector_store %arg10[%c40, %c0_40], %56 {strides = array<i32>} : memref<200x400xf32, #tpu.memory_space<vmem>>, vector<8x400xf32>,
    %c0_41 = arith.constant 0 : index
    %c21 = arith.constant 21 : index
    %58 = vector.load %arg9[%c0_41, %c21] : memref<8x484xf32, #tpu.memory_space<vmem>>, vector<8x400xf32>
    %c48 = arith.constant 48 : index
    %c0_42 = arith.constant 0 : index
    %59 = vector.load %arg10[%c48, %c0_42] : memref<200x400xf32, #tpu.memory_space<vmem>>, vector<8x400xf32>
    tpu.vector_store %arg10[%c48, %c0_42], %58 {strides = array<i32>} : memref<200x400xf32, #tpu.memory_space<vmem>>, vector<8x400xf32>,
    %c0_43 = arith.constant 0 : index
    %c22 = arith.constant 22 : index
    %60 = vector.load %arg9[%c0_43, %c22] : memref<8x484xf32, #tpu.memory_space<vmem>>, vector<8x400xf32>
    %c56 = arith.constant 56 : index
    %c0_44 = arith.constant 0 : index
    %61 = vector.load %arg10[%c56, %c0_44] : memref<200x400xf32, #tpu.memory_space<vmem>>, vector<8x400xf32>
    tpu.vector_store %arg10[%c56, %c0_44], %60 {strides = array<i32>} : memref<200x400xf32, #tpu.memory_space<vmem>>, vector<8x400xf32>,
    %c0_45 = arith.constant 0 : index
    %c23 = arith.constant 23 : index
    %62 = vector.load %arg9[%c0_45, %c23] : memref<8x484xf32, #tpu.memory_space<vmem>>, vector<8x400xf32>
    %c64 = arith.constant 64 : index
    %c0_46 = arith.constant 0 : index
    %63 = vector.load %arg10[%c64, %c0_46] : memref<200x400xf32, #tpu.memory_space<vmem>>, vector<8x400xf32>
    tpu.vector_store %arg10[%c64, %c0_46], %62 {strides = array<i32>} : memref<200x400xf32, #tpu.memory_space<vmem>>, vector<8x400xf32>,
    %c0_47 = arith.constant 0 : index
    %c24_48 = arith.constant 24 : index
    %64 = vector.load %arg9[%c0_47, %c24_48] : memref<8x484xf32, #tpu.memory_space<vmem>>, vector<8x400xf32>
    %c72 = arith.constant 72 : index
    %c0_49 = arith.constant 0 : index
    %65 = vector.load %arg10[%c72, %c0_49] : memref<200x400xf32, #tpu.memory_space<vmem>>, vector<8x400xf32>
    tpu.vector_store %arg10[%c72, %c0_49], %64 {strides = array<i32>} : memref<200x400xf32, #tpu.memory_space<vmem>>, vector<8x400xf32>,
    %c0_50 = arith.constant 0 : index
    %c40_51 = arith.constant 40 : index
    %66 = vector.load %arg9[%c0_50, %c40_51] : memref<8x484xf32, #tpu.memory_space<vmem>>, vector<8x400xf32>
    %c80 = arith.constant 80 : index
    %c0_52 = arith.constant 0 : index
    %67 = vector.load %arg10[%c80, %c0_52] : memref<200x400xf32, #tpu.memory_space<vmem>>, vector<8x400xf32>
    tpu.vector_store %arg10[%c80, %c0_52], %66 {strides = array<i32>} : memref<200x400xf32, #tpu.memory_space<vmem>>, vector<8x400xf32>,
    %c0_53 = arith.constant 0 : index
    %c41 = arith.constant 41 : index
    %68 = vector.load %arg9[%c0_53, %c41] : memref<8x484xf32, #tpu.memory_space<vmem>>, vector<8x400xf32>
    %c88 = arith.constant 88 : index
    %c0_54 = arith.constant 0 : index
    %69 = vector.load %arg10[%c88, %c0_54] : memref<200x400xf32, #tpu.memory_space<vmem>>, vector<8x400xf32>
    tpu.vector_store %arg10[%c88, %c0_54], %68 {strides = array<i32>} : memref<200x400xf32, #tpu.memory_space<vmem>>, vector<8x400xf32>,
    %c0_55 = arith.constant 0 : index
    %c42 = arith.constant 42 : index
    %70 = vector.load %arg9[%c0_55, %c42] : memref<8x484xf32, #tpu.memory_space<vmem>>, vector<8x400xf32>
    %c96 = arith.constant 96 : index
    %c0_56 = arith.constant 0 : index
    %71 = vector.load %arg10[%c96, %c0_56] : memref<200x400xf32, #tpu.memory_space<vmem>>, vector<8x400xf32>
    tpu.vector_store %arg10[%c96, %c0_56], %70 {strides = array<i32>} : memref<200x400xf32, #tpu.memory_space<vmem>>, vector<8x400xf32>,
    %c0_57 = arith.constant 0 : index
    %c43 = arith.constant 43 : index
    %72 = vector.load %arg9[%c0_57, %c43] : memref<8x484xf32, #tpu.memory_space<vmem>>, vector<8x400xf32>
    %c104_58 = arith.constant 104 : index
    %c0_59 = arith.constant 0 : index
    %73 = vector.load %arg10[%c104_58, %c0_59] : memref<200x400xf32, #tpu.memory_space<vmem>>, vector<8x400xf32>
    tpu.vector_store %arg10[%c104_58, %c0_59], %72 {strides = array<i32>} : memref<200x400xf32, #tpu.memory_space<vmem>>, vector<8x400xf32>,
    %c0_60 = arith.constant 0 : index
    %c44 = arith.constant 44 : index
    %74 = vector.load %arg9[%c0_60, %c44] : memref<8x484xf32, #tpu.memory_space<vmem>>, vector<8x400xf32>
    %c112 = arith.constant 112 : index
    %c0_61 = arith.constant 0 : index
    %75 = vector.load %arg10[%c112, %c0_61] : memref<200x400xf32, #tpu.memory_space<vmem>>, vector<8x400xf32>
    tpu.vector_store %arg10[%c112, %c0_61], %74 {strides = array<i32>} : memref<200x400xf32, #tpu.memory_space<vmem>>, vector<8x400xf32>,
    %c0_62 = arith.constant 0 : index
    %c60 = arith.constant 60 : index
    %76 = vector.load %arg9[%c0_62, %c60] : memref<8x484xf32, #tpu.memory_space<vmem>>, vector<8x400xf32>
    %c120 = arith.constant 120 : index
    %c0_63 = arith.constant 0 : index
    %77 = vector.load %arg10[%c120, %c0_63] : memref<200x400xf32, #tpu.memory_space<vmem>>, vector<8x400xf32>
    tpu.vector_store %arg10[%c120, %c0_63], %76 {strides = array<i32>} : memref<200x400xf32, #tpu.memory_space<vmem>>, vector<8x400xf32>,
    %c0_64 = arith.constant 0 : index
    %c61 = arith.constant 61 : index
    %78 = vector.load %arg9[%c0_64, %c61] : memref<8x484xf32, #tpu.memory_space<vmem>>, vector<8x400xf32>
    %c128 = arith.constant 128 : index
    %c0_65 = arith.constant 0 : index
    %79 = vector.load %arg10[%c128, %c0_65] : memref<200x400xf32, #tpu.memory_space<vmem>>, vector<8x400xf32>
    tpu.vector_store %arg10[%c128, %c0_65], %78 {strides = array<i32>} : memref<200x400xf32, #tpu.memory_space<vmem>>, vector<8x400xf32>,
    %c0_66 = arith.constant 0 : index
    %c62 = arith.constant 62 : index
    %80 = vector.load %arg9[%c0_66, %c62] : memref<8x484xf32, #tpu.memory_space<vmem>>, vector<8x400xf32>
    %c136 = arith.constant 136 : index
    %c0_67 = arith.constant 0 : index
    %81 = vector.load %arg10[%c136, %c0_67] : memref<200x400xf32, #tpu.memory_space<vmem>>, vector<8x400xf32>
    tpu.vector_store %arg10[%c136, %c0_67], %80 {strides = array<i32>} : memref<200x400xf32, #tpu.memory_space<vmem>>, vector<8x400xf32>,
    %c0_68 = arith.constant 0 : index
    %c63 = arith.constant 63 : index
    %82 = vector.load %arg9[%c0_68, %c63] : memref<8x484xf32, #tpu.memory_space<vmem>>, vector<8x400xf32>
    %c144_69 = arith.constant 144 : index
    %c0_70 = arith.constant 0 : index
    %83 = vector.load %arg10[%c144_69, %c0_70] : memref<200x400xf32, #tpu.memory_space<vmem>>, vector<8x400xf32>
    tpu.vector_store %arg10[%c144_69, %c0_70], %82 {strides = array<i32>} : memref<200x400xf32, #tpu.memory_space<vmem>>, vector<8x400xf32>,
    %c0_71 = arith.constant 0 : index
    %c64_72 = arith.constant 64 : index
    %84 = vector.load %arg9[%c0_71, %c64_72] : memref<8x484xf32, #tpu.memory_space<vmem>>, vector<8x400xf32>
    %c152 = arith.constant 152 : index
    %c0_73 = arith.constant 0 : index
    %85 = vector.load %arg10[%c152, %c0_73] : memref<200x400xf32, #tpu.memory_space<vmem>>, vector<8x400xf32>
    tpu.vector_store %arg10[%c152, %c0_73], %84 {strides = array<i32>} : memref<200x400xf32, #tpu.memory_space<vmem>>, vector<8x400xf32>,
    %c0_74 = arith.constant 0 : index
    %c80_75 = arith.constant 80 : index
    %86 = vector.load %arg9[%c0_74, %c80_75] : memref<8x484xf32, #tpu.memory_space<vmem>>, vector<8x400xf32>
    %c160 = arith.constant 160 : index
    %c0_76 = arith.constant 0 : index
    %87 = vector.load %arg10[%c160, %c0_76] : memref<200x400xf32, #tpu.memory_space<vmem>>, vector<8x400xf32>
    tpu.vector_store %arg10[%c160, %c0_76], %86 {strides = array<i32>} : memref<200x400xf32, #tpu.memory_space<vmem>>, vector<8x400xf32>,
    %c0_77 = arith.constant 0 : index
    %c81 = arith.constant 81 : index
    %88 = vector.load %arg9[%c0_77, %c81] : memref<8x484xf32, #tpu.memory_space<vmem>>, vector<8x400xf32>
    %c168 = arith.constant 168 : index
    %c0_78 = arith.constant 0 : index
    %89 = vector.load %arg10[%c168, %c0_78] : memref<200x400xf32, #tpu.memory_space<vmem>>, vector<8x400xf32>
    tpu.vector_store %arg10[%c168, %c0_78], %88 {strides = array<i32>} : memref<200x400xf32, #tpu.memory_space<vmem>>, vector<8x400xf32>,
    %c0_79 = arith.constant 0 : index
    %c82 = arith.constant 82 : index
    %90 = vector.load %arg9[%c0_79, %c82] : memref<8x484xf32, #tpu.memory_space<vmem>>, vector<8x400xf32>
    %c176 = arith.constant 176 : index
    %c0_80 = arith.constant 0 : index
    %91 = vector.load %arg10[%c176, %c0_80] : memref<200x400xf32, #tpu.memory_space<vmem>>, vector<8x400xf32>
    tpu.vector_store %arg10[%c176, %c0_80], %90 {strides = array<i32>} : memref<200x400xf32, #tpu.memory_space<vmem>>, vector<8x400xf32>,
    %c0_81 = arith.constant 0 : index
    %c83 = arith.constant 83 : index
    %92 = vector.load %arg9[%c0_81, %c83] : memref<8x484xf32, #tpu.memory_space<vmem>>, vector<8x400xf32>
    %c184_82 = arith.constant 184 : index
    %c0_83 = arith.constant 0 : index
    %93 = vector.load %arg10[%c184_82, %c0_83] : memref<200x400xf32, #tpu.memory_space<vmem>>, vector<8x400xf32>
    tpu.vector_store %arg10[%c184_82, %c0_83], %92 {strides = array<i32>} : memref<200x400xf32, #tpu.memory_space<vmem>>, vector<8x400xf32>,
    %c0_84 = arith.constant 0 : index
    %c84_85 = arith.constant 84 : index
    %94 = vector.load %arg9[%c0_84, %c84_85] : memref<8x484xf32, #tpu.memory_space<vmem>>, vector<8x400xf32>
    %c192 = arith.constant 192 : index
    %c0_86 = arith.constant 0 : index
    %95 = vector.load %arg10[%c192, %c0_86] : memref<200x400xf32, #tpu.memory_space<vmem>>, vector<8x400xf32>
    tpu.vector_store %arg10[%c192, %c0_86], %94 {strides = array<i32>} : memref<200x400xf32, #tpu.memory_space<vmem>>, vector<8x400xf32>,
    %c0_87 = arith.constant 0 : index
    %c0_88 = arith.constant 0 : index
    %96 = vector.load %arg4[%c0_87, %c0_88] : memref<8x200xf32, #tpu.memory_space<vmem>>, vector<8x200xf32>
    %c0_89 = arith.constant 0 : index
    %c0_90 = arith.constant 0 : index
    %97 = vector.load %arg10[%c0_89, %c0_90] : memref<200x400xf32, #tpu.memory_space<vmem>>, vector<200x400xf32>
    %cst_91 = arith.constant dense<0.000000e+00> : vector<8x400xf32>
    %98 = tpu.matmul %96, %97, %cst_91 {dimension_numbers = #tpu.dot_dimension_numbers<[1], [0], [0], [1], [0, 0, 1, 1], [], []>} : vector<8x200xf32>, vector<200x400xf32>, vector<8x400xf32> -> vector<8x400xf32>
    %c0_92 = arith.constant 0 : index
    %c0_93 = arith.constant 0 : index
    %99 = vector.load %arg5[%c0_92, %c0_93] : memref<8x1xf32, #tpu.memory_space<vmem>>, vector<8x1xf32>
    %100 = vector.broadcast %99 : vector<8x1xf32> to vector<8x400xf32>
    %101 = arith.addf %98, %100 : vector<8x400xf32>
    %cst_94 = arith.constant 0.000000e+00 : f32
    %102 = vector.broadcast %cst_94 : f32 to vector<8x400xf32>
    %103 = arith.cmpf oge, %101, %102 : vector<8x400xf32>
    %cst_95 = arith.constant 0.00999999977 : f32
    %104 = vector.broadcast %cst_95 : f32 to vector<8x400xf32>
    %105 = arith.mulf %104, %101 : vector<8x400xf32>
    %106 = arith.select %103, %101, %105 : vector<8x400xi1>, vector<8x400xf32>
    %c0_96 = arith.constant 0 : index
    %c42_97 = arith.constant 42 : index
    %107 = vector.load %arg9[%c0_96, %c42_97] : memref<8x484xf32, #tpu.memory_space<vmem>>, vector<8x400xf32>
    %108 = arith.addf %107, %106 : vector<8x400xf32>
    %c0_98 = arith.constant 0 : index
    %c0_99 = arith.constant 0 : index
    %109 = vector.load %arg6[%c0_98, %c0_99] : memref<8x8xf32, #tpu.memory_space<vmem>>, vector<8x8xf32>
    %cst_100 = arith.constant dense<0.000000e+00> : vector<8x400xf32>
    %110 = tpu.matmul %109, %108, %cst_100 {dimension_numbers = #tpu.dot_dimension_numbers<[1], [0], [0], [1], [0, 0, 1, 1], [], []>} : vector<8x8xf32>, vector<8x400xf32>, vector<8x400xf32> -> vector<8x400xf32>
    %c0_101 = arith.constant 0 : index
    %c0_102 = arith.constant 0 : index
    %111 = vector.load %arg7[%c0_101, %c0_102] : memref<8x1xf32, #tpu.memory_space<vmem>>, vector<8x1xf32>
    %112 = vector.broadcast %111 : vector<8x1xf32> to vector<8x400xf32>
    %113 = arith.addf %110, %112 : vector<8x400xf32>
    %cst_103 = arith.constant 0.000000e+00 : f32
    %114 = vector.broadcast %cst_103 : f32 to vector<8x400xf32>
    %115 = arith.cmpf oge, %113, %114 : vector<8x400xf32>
    %cst_104 = arith.constant 0.00999999977 : f32
    %116 = vector.broadcast %cst_104 : f32 to vector<8x400xf32>
    %117 = arith.mulf %116, %113 : vector<8x400xf32>
    %118 = arith.select %115, %113, %117 : vector<8x400xi1>, vector<8x400xf32>
    %119 = vector.extract_strided_slice %1 {offsets = [0, 0], sizes = [8, 16], strides = [1, 1]} : vector<8x256xf32> to vector<8x16xf32>
    %120 = vector.extract_strided_slice %118 {offsets = [0, 42], sizes = [8, 16], strides = [1, 1]} : vector<8x400xf32> to vector<8x16xf32>
    %121 = arith.addf %119, %120 : vector<8x16xf32>
    %c0_105 = arith.constant 0 : index
    %c0_106 = arith.constant 0 : index
    %c0_107 = arith.constant 0 : index
    %122 = vector.load %arg8[%c0_105, %c0_106, %c0_107] : memref<1x8x256xf32, #tpu.memory_space<vmem>>, vector<1x8x16xf32>
    %123 = vector.shape_cast %122 : vector<1x8x16xf32> to vector<8x16xf32>
    %124 = vector.shape_cast %121 : vector<8x16xf32> to vector<1x8x16xf32>
    tpu.vector_store %arg8[%c0_105, %c0_106, %c0_107], %124 {strides = array<i32>} : memref<1x8x256xf32, #tpu.memory_space<vmem>>, vector<1x8x16xf32>,
    %125 = vector.extract_strided_slice %1 {offsets = [0, 16], sizes = [8, 16], strides = [1, 1]} : vector<8x256xf32> to vector<8x16xf32>
    %126 = vector.extract_strided_slice %118 {offsets = [0, 62], sizes = [8, 16], strides = [1, 1]} : vector<8x400xf32> to vector<8x16xf32>
    %127 = arith.addf %125, %126 : vector<8x16xf32>
    %c0_108 = arith.constant 0 : index
    %c0_109 = arith.constant 0 : index
    %c16_110 = arith.constant 16 : index
    %128 = vector.load %arg8[%c0_108, %c0_109, %c16_110] : memref<1x8x256xf32, #tpu.memory_space<vmem>>, vector<1x8x16xf32>
    %129 = vector.shape_cast %128 : vector<1x8x16xf32> to vector<8x16xf32>
    %130 = vector.shape_cast %127 : vector<8x16xf32> to vector<1x8x16xf32>
    tpu.vector_store %arg8[%c0_108, %c0_109, %c16_110], %130 {strides = array<i32>} : memref<1x8x256xf32, #tpu.memory_space<vmem>>, vector<1x8x16xf32>,
    %131 = vector.extract_strided_slice %1 {offsets = [0, 32], sizes = [8, 16], strides = [1, 1]} : vector<8x256xf32> to vector<8x16xf32>
    %132 = vector.extract_strided_slice %118 {offsets = [0, 82], sizes = [8, 16], strides = [1, 1]} : vector<8x400xf32> to vector<8x16xf32>
    %133 = arith.addf %131, %132 : vector<8x16xf32>
    %c0_111 = arith.constant 0 : index
    %c0_112 = arith.constant 0 : index
    %c32_113 = arith.constant 32 : index
    %134 = vector.load %arg8[%c0_111, %c0_112, %c32_113] : memref<1x8x256xf32, #tpu.memory_space<vmem>>, vector<1x8x16xf32>
    %135 = vector.shape_cast %134 : vector<1x8x16xf32> to vector<8x16xf32>
    %136 = vector.shape_cast %133 : vector<8x16xf32> to vector<1x8x16xf32>
    tpu.vector_store %arg8[%c0_111, %c0_112, %c32_113], %136 {strides = array<i32>} : memref<1x8x256xf32, #tpu.memory_space<vmem>>, vector<1x8x16xf32>,
    %137 = vector.extract_strided_slice %1 {offsets = [0, 48], sizes = [8, 16], strides = [1, 1]} : vector<8x256xf32> to vector<8x16xf32>
    %138 = vector.extract_strided_slice %118 {offsets = [0, 102], sizes = [8, 16], strides = [1, 1]} : vector<8x400xf32> to vector<8x16xf32>
    %139 = arith.addf %137, %138 : vector<8x16xf32>
    %c0_114 = arith.constant 0 : index
    %c0_115 = arith.constant 0 : index
    %c48_116 = arith.constant 48 : index
    %140 = vector.load %arg8[%c0_114, %c0_115, %c48_116] : memref<1x8x256xf32, #tpu.memory_space<vmem>>, vector<1x8x16xf32>
    %141 = vector.shape_cast %140 : vector<1x8x16xf32> to vector<8x16xf32>
    %142 = vector.shape_cast %139 : vector<8x16xf32> to vector<1x8x16xf32>
    tpu.vector_store %arg8[%c0_114, %c0_115, %c48_116], %142 {strides = array<i32>} : memref<1x8x256xf32, #tpu.memory_space<vmem>>, vector<1x8x16xf32>,
    %143 = vector.extract_strided_slice %1 {offsets = [0, 64], sizes = [8, 16], strides = [1, 1]} : vector<8x256xf32> to vector<8x16xf32>
    %144 = vector.extract_strided_slice %118 {offsets = [0, 122], sizes = [8, 16], strides = [1, 1]} : vector<8x400xf32> to vector<8x16xf32>
    %145 = arith.addf %143, %144 : vector<8x16xf32>
    %c0_117 = arith.constant 0 : index
    %c0_118 = arith.constant 0 : index
    %c64_119 = arith.constant 64 : index
    %146 = vector.load %arg8[%c0_117, %c0_118, %c64_119] : memref<1x8x256xf32, #tpu.memory_space<vmem>>, vector<1x8x16xf32>
    %147 = vector.shape_cast %146 : vector<1x8x16xf32> to vector<8x16xf32>
    %148 = vector.shape_cast %145 : vector<8x16xf32> to vector<1x8x16xf32>
    tpu.vector_store %arg8[%c0_117, %c0_118, %c64_119], %148 {strides = array<i32>} : memref<1x8x256xf32, #tpu.memory_space<vmem>>, vector<1x8x16xf32>,
    %149 = vector.extract_strided_slice %1 {offsets = [0, 80], sizes = [8, 16], strides = [1, 1]} : vector<8x256xf32> to vector<8x16xf32>
    %150 = vector.extract_strided_slice %118 {offsets = [0, 142], sizes = [8, 16], strides = [1, 1]} : vector<8x400xf32> to vector<8x16xf32>
    %151 = arith.addf %149, %150 : vector<8x16xf32>
    %c0_120 = arith.constant 0 : index
    %c0_121 = arith.constant 0 : index
    %c80_122 = arith.constant 80 : index
    %152 = vector.load %arg8[%c0_120, %c0_121, %c80_122] : memref<1x8x256xf32, #tpu.memory_space<vmem>>, vector<1x8x16xf32>
    %153 = vector.shape_cast %152 : vector<1x8x16xf32> to vector<8x16xf32>
    %154 = vector.shape_cast %151 : vector<8x16xf32> to vector<1x8x16xf32>
    tpu.vector_store %arg8[%c0_120, %c0_121, %c80_122], %154 {strides = array<i32>} : memref<1x8x256xf32, #tpu.memory_space<vmem>>, vector<1x8x16xf32>,
    %155 = vector.extract_strided_slice %1 {offsets = [0, 96], sizes = [8, 16], strides = [1, 1]} : vector<8x256xf32> to vector<8x16xf32>
    %156 = vector.extract_strided_slice %118 {offsets = [0, 162], sizes = [8, 16], strides = [1, 1]} : vector<8x400xf32> to vector<8x16xf32>
    %157 = arith.addf %155, %156 : vector<8x16xf32>
    %c0_123 = arith.constant 0 : index
    %c0_124 = arith.constant 0 : index
    %c96_125 = arith.constant 96 : index
    %158 = vector.load %arg8[%c0_123, %c0_124, %c96_125] : memref<1x8x256xf32, #tpu.memory_space<vmem>>, vector<1x8x16xf32>
    %159 = vector.shape_cast %158 : vector<1x8x16xf32> to vector<8x16xf32>
    %160 = vector.shape_cast %157 : vector<8x16xf32> to vector<1x8x16xf32>
    tpu.vector_store %arg8[%c0_123, %c0_124, %c96_125], %160 {strides = array<i32>} : memref<1x8x256xf32, #tpu.memory_space<vmem>>, vector<1x8x16xf32>,
    %161 = vector.extract_strided_slice %1 {offsets = [0, 112], sizes = [8, 16], strides = [1, 1]} : vector<8x256xf32> to vector<8x16xf32>
    %162 = vector.extract_strided_slice %118 {offsets = [0, 182], sizes = [8, 16], strides = [1, 1]} : vector<8x400xf32> to vector<8x16xf32>
    %163 = arith.addf %161, %162 : vector<8x16xf32>
    %c0_126 = arith.constant 0 : index
    %c0_127 = arith.constant 0 : index
    %c112_128 = arith.constant 112 : index
    %164 = vector.load %arg8[%c0_126, %c0_127, %c112_128] : memref<1x8x256xf32, #tpu.memory_space<vmem>>, vector<1x8x16xf32>
    %165 = vector.shape_cast %164 : vector<1x8x16xf32> to vector<8x16xf32>
    %166 = vector.shape_cast %163 : vector<8x16xf32> to vector<1x8x16xf32>
    tpu.vector_store %arg8[%c0_126, %c0_127, %c112_128], %166 {strides = array<i32>} : memref<1x8x256xf32, #tpu.memory_space<vmem>>, vector<1x8x16xf32>,
    %167 = vector.extract_strided_slice %1 {offsets = [0, 128], sizes = [8, 16], strides = [1, 1]} : vector<8x256xf32> to vector<8x16xf32>
    %168 = vector.extract_strided_slice %118 {offsets = [0, 202], sizes = [8, 16], strides = [1, 1]} : vector<8x400xf32> to vector<8x16xf32>
    %169 = arith.addf %167, %168 : vector<8x16xf32>
    %c0_129 = arith.constant 0 : index
    %c0_130 = arith.constant 0 : index
    %c128_131 = arith.constant 128 : index
    %170 = vector.load %arg8[%c0_129, %c0_130, %c128_131] : memref<1x8x256xf32, #tpu.memory_space<vmem>>, vector<1x8x16xf32>
    %171 = vector.shape_cast %170 : vector<1x8x16xf32> to vector<8x16xf32>
    %172 = vector.shape_cast %169 : vector<8x16xf32> to vector<1x8x16xf32>
    tpu.vector_store %arg8[%c0_129, %c0_130, %c128_131], %172 {strides = array<i32>} : memref<1x8x256xf32, #tpu.memory_space<vmem>>, vector<1x8x16xf32>,
    %173 = vector.extract_strided_slice %1 {offsets = [0, 144], sizes = [8, 16], strides = [1, 1]} : vector<8x256xf32> to vector<8x16xf32>
    %174 = vector.extract_strided_slice %118 {offsets = [0, 222], sizes = [8, 16], strides = [1, 1]} : vector<8x400xf32> to vector<8x16xf32>
    %175 = arith.addf %173, %174 : vector<8x16xf32>
    %c0_132 = arith.constant 0 : index
    %c0_133 = arith.constant 0 : index
    %c144_134 = arith.constant 144 : index
    %176 = vector.load %arg8[%c0_132, %c0_133, %c144_134] : memref<1x8x256xf32, #tpu.memory_space<vmem>>, vector<1x8x16xf32>
    %177 = vector.shape_cast %176 : vector<1x8x16xf32> to vector<8x16xf32>
    %178 = vector.shape_cast %175 : vector<8x16xf32> to vector<1x8x16xf32>
    tpu.vector_store %arg8[%c0_132, %c0_133, %c144_134], %178 {strides = array<i32>} : memref<1x8x256xf32, #tpu.memory_space<vmem>>, vector<1x8x16xf32>,
    %179 = vector.extract_strided_slice %1 {offsets = [0, 160], sizes = [8, 16], strides = [1, 1]} : vector<8x256xf32> to vector<8x16xf32>
    %180 = vector.extract_strided_slice %118 {offsets = [0, 242], sizes = [8, 16], strides = [1, 1]} : vector<8x400xf32> to vector<8x16xf32>
    %181 = arith.addf %179, %180 : vector<8x16xf32>
    %c0_135 = arith.constant 0 : index
    %c0_136 = arith.constant 0 : index
    %c160_137 = arith.constant 160 : index
    %182 = vector.load %arg8[%c0_135, %c0_136, %c160_137] : memref<1x8x256xf32, #tpu.memory_space<vmem>>, vector<1x8x16xf32>
    %183 = vector.shape_cast %182 : vector<1x8x16xf32> to vector<8x16xf32>
    %184 = vector.shape_cast %181 : vector<8x16xf32> to vector<1x8x16xf32>
    tpu.vector_store %arg8[%c0_135, %c0_136, %c160_137], %184 {strides = array<i32>} : memref<1x8x256xf32, #tpu.memory_space<vmem>>, vector<1x8x16xf32>,
    %185 = vector.extract_strided_slice %1 {offsets = [0, 176], sizes = [8, 16], strides = [1, 1]} : vector<8x256xf32> to vector<8x16xf32>
    %186 = vector.extract_strided_slice %118 {offsets = [0, 262], sizes = [8, 16], strides = [1, 1]} : vector<8x400xf32> to vector<8x16xf32>
    %187 = arith.addf %185, %186 : vector<8x16xf32>
    %c0_138 = arith.constant 0 : index
    %c0_139 = arith.constant 0 : index
    %c176_140 = arith.constant 176 : index
    %188 = vector.load %arg8[%c0_138, %c0_139, %c176_140] : memref<1x8x256xf32, #tpu.memory_space<vmem>>, vector<1x8x16xf32>
    %189 = vector.shape_cast %188 : vector<1x8x16xf32> to vector<8x16xf32>
    %190 = vector.shape_cast %187 : vector<8x16xf32> to vector<1x8x16xf32>
    tpu.vector_store %arg8[%c0_138, %c0_139, %c176_140], %190 {strides = array<i32>} : memref<1x8x256xf32, #tpu.memory_space<vmem>>, vector<1x8x16xf32>,
    %191 = vector.extract_strided_slice %1 {offsets = [0, 192], sizes = [8, 16], strides = [1, 1]} : vector<8x256xf32> to vector<8x16xf32>
    %192 = vector.extract_strided_slice %118 {offsets = [0, 282], sizes = [8, 16], strides = [1, 1]} : vector<8x400xf32> to vector<8x16xf32>
    %193 = arith.addf %191, %192 : vector<8x16xf32>
    %c0_141 = arith.constant 0 : index
    %c0_142 = arith.constant 0 : index
    %c192_143 = arith.constant 192 : index
    %194 = vector.load %arg8[%c0_141, %c0_142, %c192_143] : memref<1x8x256xf32, #tpu.memory_space<vmem>>, vector<1x8x16xf32>
    %195 = vector.shape_cast %194 : vector<1x8x16xf32> to vector<8x16xf32>
    %196 = vector.shape_cast %193 : vector<8x16xf32> to vector<1x8x16xf32>
    tpu.vector_store %arg8[%c0_141, %c0_142, %c192_143], %196 {strides = array<i32>} : memref<1x8x256xf32, #tpu.memory_space<vmem>>, vector<1x8x16xf32>,
    %197 = vector.extract_strided_slice %1 {offsets = [0, 208], sizes = [8, 16], strides = [1, 1]} : vector<8x256xf32> to vector<8x16xf32>
    %198 = vector.extract_strided_slice %118 {offsets = [0, 302], sizes = [8, 16], strides = [1, 1]} : vector<8x400xf32> to vector<8x16xf32>
    %199 = arith.addf %197, %198 : vector<8x16xf32>
    %c0_144 = arith.constant 0 : index
    %c0_145 = arith.constant 0 : index
    %c208 = arith.constant 208 : index
    %200 = vector.load %arg8[%c0_144, %c0_145, %c208] : memref<1x8x256xf32, #tpu.memory_space<vmem>>, vector<1x8x16xf32>
    %201 = vector.shape_cast %200 : vector<1x8x16xf32> to vector<8x16xf32>
    %202 = vector.shape_cast %199 : vector<8x16xf32> to vector<1x8x16xf32>
    tpu.vector_store %arg8[%c0_144, %c0_145, %c208], %202 {strides = array<i32>} : memref<1x8x256xf32, #tpu.memory_space<vmem>>, vector<1x8x16xf32>,
    %203 = vector.extract_strided_slice %1 {offsets = [0, 224], sizes = [8, 16], strides = [1, 1]} : vector<8x256xf32> to vector<8x16xf32>
    %204 = vector.extract_strided_slice %118 {offsets = [0, 322], sizes = [8, 16], strides = [1, 1]} : vector<8x400xf32> to vector<8x16xf32>
    %205 = arith.addf %203, %204 : vector<8x16xf32>
    %c0_146 = arith.constant 0 : index
    %c0_147 = arith.constant 0 : index
    %c224_148 = arith.constant 224 : index
    %206 = vector.load %arg8[%c0_146, %c0_147, %c224_148] : memref<1x8x256xf32, #tpu.memory_space<vmem>>, vector<1x8x16xf32>
    %207 = vector.shape_cast %206 : vector<1x8x16xf32> to vector<8x16xf32>
    %208 = vector.shape_cast %205 : vector<8x16xf32> to vector<1x8x16xf32>
    tpu.vector_store %arg8[%c0_146, %c0_147, %c224_148], %208 {strides = array<i32>} : memref<1x8x256xf32, #tpu.memory_space<vmem>>, vector<1x8x16xf32>,
    %209 = vector.extract_strided_slice %1 {offsets = [0, 240], sizes = [8, 16], strides = [1, 1]} : vector<8x256xf32> to vector<8x16xf32>
    %210 = vector.extract_strided_slice %118 {offsets = [0, 342], sizes = [8, 16], strides = [1, 1]} : vector<8x400xf32> to vector<8x16xf32>
    %211 = arith.addf %209, %210 : vector<8x16xf32>
    %c0_149 = arith.constant 0 : index
    %c0_150 = arith.constant 0 : index
    %c240 = arith.constant 240 : index
    %212 = vector.load %arg8[%c0_149, %c0_150, %c240] : memref<1x8x256xf32, #tpu.memory_space<vmem>>, vector<1x8x16xf32>
    %213 = vector.shape_cast %212 : vector<1x8x16xf32> to vector<8x16xf32>
    %214 = vector.shape_cast %211 : vector<8x16xf32> to vector<1x8x16xf32>
    tpu.vector_store %arg8[%c0_149, %c0_150, %c240], %214 {strides = array<i32>} : memref<1x8x256xf32, #tpu.memory_space<vmem>>, vector<1x8x16xf32>,
    return
  }
  func.func @transform_0(%arg0: i32) -> (i32, i32, i32) {
    %c0_i32 = arith.constant 0 : i32
    %c0_i32_0 = arith.constant 0 : i32
    %c0_i32_1 = arith.constant 0 : i32
    return %arg0, %c0_i32, %c0_i32_0 : i32, i32, i32
  }
  func.func @transform_1(%arg0: i32) -> (i32, i32) {
    %c0_i32 = arith.constant 0 : i32
    %c0_i32_0 = arith.constant 0 : i32
    %c0_i32_1 = arith.constant 0 : i32
    return %c0_i32, %c0_i32_0 : i32, i32
  }
  func.func @transform_2(%arg0: i32) -> (i32, i32) {
    %c0_i32 = arith.constant 0 : i32
    %c0_i32_0 = arith.constant 0 : i32
    %c0_i32_1 = arith.constant 0 : i32
    return %c0_i32, %c0_i32_0 : i32, i32
  }
  func.func @transform_3(%arg0: i32) -> (i32, i32) {
    %c0_i32 = arith.constant 0 : i32
    %c0_i32_0 = arith.constant 0 : i32
    %c0_i32_1 = arith.constant 0 : i32
    return %c0_i32, %c0_i32_0 : i32, i32
  }
  func.func @transform_4(%arg0: i32) -> (i32, i32) {
    %c0_i32 = arith.constant 0 : i32
    %c0_i32_0 = arith.constant 0 : i32
    %c0_i32_1 = arith.constant 0 : i32
    return %c0_i32, %c0_i32_0 : i32, i32
  }
  func.func @transform_5(%arg0: i32) -> (i32, i32) {
    %c0_i32 = arith.constant 0 : i32
    %c0_i32_0 = arith.constant 0 : i32
    %c0_i32_1 = arith.constant 0 : i32
    return %c0_i32, %c0_i32_0 : i32, i32
  }
  func.func @transform_6(%arg0: i32) -> (i32, i32) {
    %c0_i32 = arith.constant 0 : i32
    %c0_i32_0 = arith.constant 0 : i32
    %c0_i32_1 = arith.constant 0 : i32
    return %c0_i32, %c0_i32_0 : i32, i32
  }
  func.func @transform_7(%arg0: i32) -> (i32, i32, i32) {
    %c0_i32 = arith.constant 0 : i32
    %c0_i32_0 = arith.constant 0 : i32
    %c0_i32_1 = arith.constant 0 : i32
    return %arg0, %c0_i32, %c0_i32_0 : i32, i32, i32
  }
}

</mosaic_0001>

<llo_original>
// kernel: tpu_custom_call.1
$region0: #{tpu_custom_call.1}
  #allocation0 [shape = 'u32[]', space=smem, size = 0x4, offset = 0x4, fixed_abs, tag = 'smem constant byte address 0x4 - core index']
  #allocation1 [shape = 'u32[144,128]{1,0:T(1,128)}', space=vmem, size = 0x12000, scoped, tag = 'internal scratch']
  #allocation2 [shape = 'f32[8,484]{1,0:T(8,128)}', space=vmem, size = 0x4000, scoped, tag = 'scratch operand']
  #allocation3 [shape = 'f32[200,400]{1,0:T(8,128)}', space=vmem, size = 0x64000, scoped, tag = 'scratch operand']
  %s0 = inlined_call_operand.hbm [shape: f32[2,8,256], index: 0, kind: input, shape index: {}]
  %s1 = inlined_call_operand.vmem [shape: f32[8,8], index: 1, kind: input, shape index: {}]
  %s2 = inlined_call_operand.vmem [shape: f32[8,1], index: 2, kind: input, shape index: {}]
  %s3 = inlined_call_operand.vmem [shape: f32[8,200], index: 3, kind: input, shape index: {}]
  %s4 = inlined_call_operand.vmem [shape: f32[8,1], index: 4, kind: input, shape index: {}]
  %s5 = inlined_call_operand.vmem [shape: f32[8,8], index: 5, kind: input, shape index: {}]
  %s6 = inlined_call_operand.vmem [shape: f32[8,1], index: 6, kind: input, shape index: {}]
  %s7 = inlined_call_operand.hbm [shape: f32[2,8,256], index: 7, kind: output, shape index: {}]
  %s8 = sld [smem:[#allocation0]]
  $region65: #{tpu_custom_call.1} parent=0
    _
  %s10 = ssub.s32 1, %s8
  %s11 = scalar_select 0, %s10, %s8
  $region1: #{tpu_custom_call.1} parent=0
    #allocation4 [shape = 'u8[16384]{0}', space=vmem, size = 0x4000, scoped, tag = 'input window, operand 0']
    #allocation5 [shape = 's32[2]{0}', space=sflag, size = 0x8, scoped, tag = 'scoped memory for tpu_custom_call.1']
    #allocation6 [shape = 's32[2]{0}', space=sflag, size = 0x8, scoped, tag = 'scoped memory for tpu_custom_call.1']
    #allocation7 [shape = 'u8[16384]{0}', space=vmem, size = 0x4000, scoped, tag = 'output window, operand 0']
    %12 = vsyncpa [#allocation5], 0
    %s13 = scalar_lea.sflag [#allocation5], 1
    %14 = vsyncpa %s13, 0
    %15 = vsyncpa [#allocation6], 0
    %s16 = scalar_lea.sflag [#allocation6], 1
    %17 = vsyncpa %s16, 0
    loop: start=0, step=1, limit=4
    $region2: #{tpu_custom_call.1} parent=1 // loop_pre_header
      _
    $region3: #{tpu_custom_call.1} parent=1 // loop_header
      %s19 = sphi 0, %s23
      %p20 = scmp.ge.s32.totalorder %s19, 4
      %s29 = sphi 0, %s31
      %s32 = sphi 0, %s29
      %s33 = sphi 0, %s32
      %s49 = sphi 0, %s33
      %s53 = sphi 0, %s53
      %s55 = sphi 0, %s53
      %s56 = sphi 0, %s55
      %s70 = sphi 0, %s56
      %s74 = sphi 0, %s74
      %s76 = sphi 0, %s74
      %s77 = sphi 0, %s76
      %s91 = sphi 0, %s77
      %s95 = sphi 0, %s95
      %s97 = sphi 0, %s95
      %s98 = sphi 0, %s97
      %s112 = sphi 0, %s98
      %s116 = sphi 0, %s116
      %s118 = sphi 0, %s116
      %s119 = sphi 0, %s118
      %s133 = sphi 0, %s119
      %s137 = sphi 0, %s137
      %s139 = sphi 0, %s137
      %s140 = sphi 0, %s139
      %s154 = sphi 0, %s140
      %s158 = sphi 0, %s158
      %s160 = sphi 0, %s158
      %s161 = sphi 0, %s160
      %s175 = sphi 0, %s161
      %s181 = sphi 0, %s183
      %s184 = sphi 0, %s181
      %s185 = sphi 0, %s184
      %s201 = sphi 0, %s185
    $region4: #{tpu_custom_call.1} parent=1 // loop_header_branch
      %22 = sbr.rel (%p20) target = $region8
    $region5: #{tpu_custom_call.1} parent=1 // loop_body
      %s24 = ssub.s32 %s19, 1
      %s25 = ssub.s32 %s19, 2
      %s26 = sadd.s32 %s19, 1
      %s27 = ssub.s32 %s19, %s26
      %p28 = scmp.eq.s32.totalorder %s27, 0
      %s30 = sadd.s32 %s29, 1
      %s31 = scalar_select %p28, %s29, %s30
      %p34 = pneg %p28
      %p35 = scmp.eq.s32.totalorder %s19, 1
      %p36 = por %p34, %p35
      %p37 = scmp.ne.s32.totalorder %s29, %s32
      %p38 = scmp.eq.s32.totalorder %s19, 0
      %p39 = por %p37, %p38
      %p40 = scmp.ne.s32.totalorder %s29, %s32
      %p41 = scmp.eq.s32.totalorder %s24, 1
      %p42 = por %p40, %p41
      %p43 = scmp.ne.s32.totalorder %s32, %s33
      %p44 = scmp.eq.s32.totalorder %s24, 0
      %p45 = por %p43, %p44
      %p46 = scmp.ne.s32.totalorder %s32, %s33
      %p47 = scmp.eq.s32.totalorder %s25, 1
      %p48 = por %p46, %p47
      %p50 = scmp.ne.s32.totalorder %s33, %s49
      %p51 = scmp.eq.s32.totalorder %s25, 0
      %p52 = por %p50, %p51
      %s54 = sadd.s32 %s53, 1
      %p57 = scmp.eq.s32.totalorder %s19, 1
      %p58 = scmp.ne.s32.totalorder %s53, %s55
      %p59 = scmp.eq.s32.totalorder %s19, 0
      %p60 = por %p58, %p59
      %p61 = scmp.ne.s32.totalorder %s53, %s55
      %p62 = scmp.eq.s32.totalorder %s24, 1
      %p63 = por %p61, %p62
      %p64 = scmp.ne.s32.totalorder %s55, %s56
      %p65 = scmp.eq.s32.totalorder %s24, 0
      %p66 = por %p64, %p65
      %p67 = scmp.ne.s32.totalorder %s55, %s56
      %p68 = scmp.eq.s32.totalorder %s25, 1
      %p69 = por %p67, %p68
      %p71 = scmp.ne.s32.totalorder %s56, %s70
      %p72 = scmp.eq.s32.totalorder %s25, 0
      %p73 = por %p71, %p72
      %s75 = sadd.s32 %s74, 1
      %p78 = scmp.eq.s32.totalorder %s19, 1
      %p79 = scmp.ne.s32.totalorder %s74, %s76
      %p80 = scmp.eq.s32.totalorder %s19, 0
      %p81 = por %p79, %p80
      %p82 = scmp.ne.s32.totalorder %s74, %s76
      %p83 = scmp.eq.s32.totalorder %s24, 1
      %p84 = por %p82, %p83
      %p85 = scmp.ne.s32.totalorder %s76, %s77
      %p86 = scmp.eq.s32.totalorder %s24, 0
      %p87 = por %p85, %p86
      %p88 = scmp.ne.s32.totalorder %s76, %s77
      %p89 = scmp.eq.s32.totalorder %s25, 1
      %p90 = por %p88, %p89
      %p92 = scmp.ne.s32.totalorder %s77, %s91
      %p93 = scmp.eq.s32.totalorder %s25, 0
      %p94 = por %p92, %p93
      %s96 = sadd.s32 %s95, 1
      %p99 = scmp.eq.s32.totalorder %s19, 1
      %p100 = scmp.ne.s32.totalorder %s95, %s97
      %p101 = scmp.eq.s32.totalorder %s19, 0
      %p102 = por %p100, %p101
      %p103 = scmp.ne.s32.totalorder %s95, %s97
      %p104 = scmp.eq.s32.totalorder %s24, 1
      %p105 = por %p103, %p104
      %p106 = scmp.ne.s32.totalorder %s97, %s98
      %p107 = scmp.eq.s32.totalorder %s24, 0
      %p108 = por %p106, %p107
      %p109 = scmp.ne.s32.totalorder %s97, %s98
      %p110 = scmp.eq.s32.totalorder %s25, 1
      %p111 = por %p109, %p110
      %p113 = scmp.ne.s32.totalorder %s98, %s112
      %p114 = scmp.eq.s32.totalorder %s25, 0
      %p115 = por %p113, %p114
      %s117 = sadd.s32 %s116, 1
      %p120 = scmp.eq.s32.totalorder %s19, 1
      %p121 = scmp.ne.s32.totalorder %s116, %s118
      %p122 = scmp.eq.s32.totalorder %s19, 0
      %p123 = por %p121, %p122
      %p124 = scmp.ne.s32.totalorder %s116, %s118
      %p125 = scmp.eq.s32.totalorder %s24, 1
      %p126 = por %p124, %p125
      %p127 = scmp.ne.s32.totalorder %s118, %s119
      %p128 = scmp.eq.s32.totalorder %s24, 0
      %p129 = por %p127, %p128
      %p130 = scmp.ne.s32.totalorder %s118, %s119
      %p131 = scmp.eq.s32.totalorder %s25, 1
      %p132 = por %p130, %p131
      %p134 = scmp.ne.s32.totalorder %s119, %s133
      %p135 = scmp.eq.s32.totalorder %s25, 0
      %p136 = por %p134, %p135
      %s138 = sadd.s32 %s137, 1
      %p141 = scmp.eq.s32.totalorder %s19, 1
      %p142 = scmp.ne.s32.totalorder %s137, %s139
      %p143 = scmp.eq.s32.totalorder %s19, 0
      %p144 = por %p142, %p143
      %p145 = scmp.ne.s32.totalorder %s137, %s139
      %p146 = scmp.eq.s32.totalorder %s24, 1
      %p147 = por %p145, %p146
      %p148 = scmp.ne.s32.totalorder %s139, %s140
      %p149 = scmp.eq.s32.totalorder %s24, 0
      %p150 = por %p148, %p149
      %p151 = scmp.ne.s32.totalorder %s139, %s140
      %p152 = scmp.eq.s32.totalorder %s25, 1
      %p153 = por %p151, %p152
      %p155 = scmp.ne.s32.totalorder %s140, %s154
      %p156 = scmp.eq.s32.totalorder %s25, 0
      %p157 = por %p155, %p156
      %s159 = sadd.s32 %s158, 1
      %p162 = scmp.eq.s32.totalorder %s19, 1
      %p163 = scmp.ne.s32.totalorder %s158, %s160
      %p164 = scmp.eq.s32.totalorder %s19, 0
      %p165 = por %p163, %p164
      %p166 = scmp.ne.s32.totalorder %s158, %s160
      %p167 = scmp.eq.s32.totalorder %s24, 1
      %p168 = por %p166, %p167
      %p169 = scmp.ne.s32.totalorder %s160, %s161
      %p170 = scmp.eq.s32.totalorder %s24, 0
      %p171 = por %p169, %p170
      %p172 = scmp.ne.s32.totalorder %s160, %s161
      %p173 = scmp.eq.s32.totalorder %s25, 1
      %p174 = por %p172, %p173
      %p176 = scmp.ne.s32.totalorder %s161, %s175
      %p177 = scmp.eq.s32.totalorder %s25, 0
      %p178 = por %p176, %p177
      %s179 = ssub.s32 %s19, %s26
      %p180 = scmp.eq.s32.totalorder %s179, 0
      %s182 = sadd.s32 %s181, 1
      %s183 = scalar_select %p180, %s181, %s182
      %p186 = pneg %p180
      %p187 = scmp.eq.s32.totalorder %s19, 1
      %p188 = por %p186, %p187
      %p189 = scmp.ne.s32.totalorder %s181, %s184
      %p190 = scmp.eq.s32.totalorder %s19, 0
      %p191 = por %p189, %p190
      %p192 = scmp.ne.s32.totalorder %s181, %s184
      %p193 = scmp.eq.s32.totalorder %s24, 1
      %p194 = por %p192, %p193
      %p195 = scmp.ne.s32.totalorder %s184, %s185
      %p196 = scmp.eq.s32.totalorder %s24, 0
      %p197 = por %p195, %p196
      %p198 = scmp.ne.s32.totalorder %s184, %s185
      %p199 = scmp.eq.s32.totalorder %s25, 1
      %p200 = por %p198, %p199
      %p202 = scmp.ne.s32.totalorder %s185, %s201
      %p203 = scmp.eq.s32.totalorder %s25, 0
      %p204 = por %p202, %p203
      %p205 = scmp.le.s32.totalorder 1, %s19
      %p206 = scmp.lt.s32.totalorder %s19, 3
      %p207 = pnand %p205, %p206
      %p208 = pneg %p207
      // Predicated region
      $region9: #{tpu_custom_call.1} parent=5 // pred_check
        _
      $region10: #{tpu_custom_call.1} parent=5 // pred_check_branch
        %210 = sbr.rel (%p207) target = $region12
      $region11: #{tpu_custom_call.1} parent=5 // pred_region
        %s211 = ssub.s32 %s19, 1
        // Predicated region
        $region13: #{tpu_custom_call.1} parent=11 // pred_check
          %p212 = pneg %p66
        $region14: #{tpu_custom_call.1} parent=11 // pred_check_branch
          %214 = sbr.rel (%p212) target = $region16
        $region15: #{tpu_custom_call.1} parent=11 // pred_region
          _
        $region16: #{tpu_custom_call.1} parent=11 // pred_fallthru
          _
        // Predicated region
        $region17: #{tpu_custom_call.1} parent=11 // pred_check
          %p215 = pneg %p87
        $region18: #{tpu_custom_call.1} parent=11 // pred_check_branch
          %217 = sbr.rel (%p215) target = $region20
        $region19: #{tpu_custom_call.1} parent=11 // pred_region
          _
        $region20: #{tpu_custom_call.1} parent=11 // pred_fallthru
          _
        // Predicated region
        $region21: #{tpu_custom_call.1} parent=11 // pred_check
          %p218 = pneg %p108
        $region22: #{tpu_custom_call.1} parent=11 // pred_check_branch
          %220 = sbr.rel (%p218) target = $region24
        $region23: #{tpu_custom_call.1} parent=11 // pred_region
          _
        $region24: #{tpu_custom_call.1} parent=11 // pred_fallthru
          _
        // Predicated region
        $region25: #{tpu_custom_call.1} parent=11 // pred_check
          %p221 = pneg %p129
        $region26: #{tpu_custom_call.1} parent=11 // pred_check_branch
          %223 = sbr.rel (%p221) target = $region28
        $region27: #{tpu_custom_call.1} parent=11 // pred_region
          _
        $region28: #{tpu_custom_call.1} parent=11 // pred_fallthru
          _
        // Predicated region
        $region29: #{tpu_custom_call.1} parent=11 // pred_check
          %p224 = pneg %p150
        $region30: #{tpu_custom_call.1} parent=11 // pred_check_branch
          %226 = sbr.rel (%p224) target = $region32
        $region31: #{tpu_custom_call.1} parent=11 // pred_region
          _
        $region32: #{tpu_custom_call.1} parent=11 // pred_fallthru
          _
        // Predicated region
        $region33: #{tpu_custom_call.1} parent=11 // pred_check
          %p227 = pneg %p171
        $region34: #{tpu_custom_call.1} parent=11 // pred_check_branch
          %229 = sbr.rel (%p227) target = $region36
        $region35: #{tpu_custom_call.1} parent=11 // pred_region
          _
        $region36: #{tpu_custom_call.1} parent=11 // pred_fallthru
          _
      $region12: #{tpu_custom_call.1} parent=5 // pred_fallthru
        _
      %p230 = scmp.lt.s32.totalorder %s19, 2
      // Predicated region
      $region37: #{tpu_custom_call.1} parent=5 // pred_check
        %p231 = pneg %p230
      $region38: #{tpu_custom_call.1} parent=5 // pred_check_branch
        %233 = sbr.rel (%p231) target = $region40
      $region39: #{tpu_custom_call.1} parent=5 // pred_region
        // Predicated region
        $region41: #{tpu_custom_call.1} parent=39 // pred_check
          %p234 = pneg %p39
        $region42: #{tpu_custom_call.1} parent=39 // pred_check_branch
          %236 = sbr.rel (%p234) target = $region44
        $region43: #{tpu_custom_call.1} parent=39 // pred_region
          %s237 = sand.u32 %s29, 1
          %s238 = scalar_lea.sflag [#allocation5], %s237
          %s239 = sand.u32 %s29, 1
          %s240 = smul.addr %s239, 16
          %s241 = scalar_lea.vmem [#allocation4], %s240
          %s243 = ssub.s32 256, 256
          %244 = vsyncadd %s238, %s243
          %s245 = smul.addr %s19, 2
          %s246 = smul.addr %s245, 128
          %s247 = scalar_lea.hbm %s0, %s246
          %s249 = sshll.u32 %s241, 4
          %s250 = int_to_ptr.vmem [resolvable:$true] %s249
          %252 = dma.hbm_to_vmem [thread:$0]  %s247, 256, %s250, %s238
        $region44: #{tpu_custom_call.1} parent=39 // pred_fallthru
          _
      $region40: #{tpu_custom_call.1} parent=5 // pred_fallthru
        _
      %p253 = scmp.le.s32.totalorder 1, %s19
      %p254 = scmp.lt.s32.totalorder %s19, 3
      %p255 = pnand %p253, %p254
      %p256 = pneg %p255
      // Predicated region
      $region45: #{tpu_custom_call.1} parent=5 // pred_check
        _
      $region46: #{tpu_custom_call.1} parent=5 // pred_check_branch
        %258 = sbr.rel (%p255) target = $region48
      $region47: #{tpu_custom_call.1} parent=5 // pred_region
        %s259 = ssub.s32 %s19, 1
        %s260 = sand.u32 %s32, 1
        %s261 = scalar_lea.sflag [#allocation5], %s260
        %s262 = sand.u32 %s32, 1
        %s263 = smul.addr %s262, 16
        %s264 = scalar_lea.vmem [#allocation4], %s263
        // Predicated region
        $region49: #{tpu_custom_call.1} parent=47 // pred_check
          %p265 = pneg %p45
        $region50: #{tpu_custom_call.1} parent=47 // pred_check_branch
          %267 = sbr.rel (%p265) target = $region52
        $region51: #{tpu_custom_call.1} parent=47 // pred_region
          %268 = dma.done %s261, 256
        $region52: #{tpu_custom_call.1} parent=47 // pred_fallthru
          _
        %s269 = sand.u32 %s32, 1
        %s270 = scalar_lea.sflag [#allocation5], %s269
        %s271 = sand.u32 %s32, 1
        %s272 = smul.addr %s271, 16
        %s273 = scalar_lea.vmem [#allocation4], %s272
        %p274 = pneg %p45
        %p275 = pneg %p42
        %p276 = pneg %p66
        %p277 = pneg %p63
        %p278 = pneg %p87
        %p279 = pneg %p84
        %p280 = pneg %p108
        %p281 = pneg %p105
        %p282 = pneg %p129
        %p283 = pneg %p126
        %p284 = pneg %p150
        %p285 = pneg %p147
        %p286 = pneg %p171
        %p287 = pneg %p168
        %p288 = pneg %p197
        %p289 = pneg %p194
        %s290 = sand.u32 %s184, 1
        %s291 = scalar_lea.sflag [#allocation6], %s290
        %s292 = sand.u32 %s184, 1
        %s293 = smul.addr %s292, 16
        %s294 = scalar_lea.vmem [#allocation7], %s293
        %v295 = vld [vmem:[%s264] sm:$0xff]
        %v296 = vld [vmem:[%s264 + $0x8] sm:$0xff]
        %v297 = vld [vmem:[%s1] sm:$0xff]
        %v298 = vld [vmem:[%s2] sm:$0xff]
        %300 = vset.pattern.permute.xlu0 0
        %301 = vperm.xlu0 %300, %v298
        %v302 = vpop.permute.xlu0 %301
        %vm304 = vcmask 64512
        %v306 = vsel %vm304, %v297, 0
        %308 = vmatprep.subr.mxu0 %v296
        %309 = vmatpush1.msra.mxu0 %v295
        %310 = vmatprep.subr.mxu0 0.0
        %311 = vmatpush1.msra.mxu0 0.0
        %312 = vmatprep.subr.mxu0 0.0
        %313 = vmatpush1.msra.mxu0 0.0
        %314 = vmatprep.subr.mxu0 0.0
        %315 = vmatpush1.msra.mxu0 0.0
        %316 = vmatprep.subr.mxu0 0.0
        %317 = vmatpush1.msra.mxu0 0.0
        %318 = vmatprep.subr.mxu0 0.0
        %319 = vmatpush1.msra.mxu0 0.0
        %320 = vmatprep.subr.mxu0 0.0
        %321 = vmatpush1.msra.mxu0 0.0
        %322 = vmatprep.subr.mxu0 0.0
        %323 = vmatpush1.msra.mxu0 0.0
        %324 = vmatprep.subr.mxu0 0.0
        %325 = vmatpush1.msra.mxu0 0.0
        %326 = vmatprep.subr.mxu0 0.0
        %327 = vmatpush1.msra.mxu0 0.0
        %328 = vmatprep.subr.mxu0 0.0
        %329 = vmatpush1.msra.mxu0 0.0
        %330 = vmatprep.subr.mxu0 0.0
        %331 = vmatpush1.msra.mxu0 0.0
        %332 = vmatprep.subr.mxu0 0.0
        %333 = vmatpush1.msra.mxu0 0.0
        %334 = vmatprep.subr.mxu0 0.0
        %335 = vmatpush1.msra.mxu0 0.0
        %336 = vmatprep.subr.mxu0 0.0
        %337 = vmatpush1.msra.mxu0 0.0
        %338 = vmatprep.subr.mxu0 0.0
        %339 = vmatpush1.msra.mxu0 0.0
        %340 = vmatprep.subr.mxu0 0.0
        %341 = vmatpush1.msra.mxu0 0.0
        %342 = vmatprep.subr.mxu0 0.0
        %343 = vmatpush1.msra.mxu0 0.0
        %344 = vmatprep.subr.mxu0 0.0
        %345 = vmatpush1.msra.mxu0 0.0
        %346 = vmatprep.subr.mxu0 0.0
        %347 = vmatpush1.msra.mxu0 0.0
        %348 = vmatprep.subr.mxu0 0.0
        %349 = vmatpush1.msra.mxu0 0.0
        %350 = vmatprep.subr.mxu0 0.0
        %351 = vmatpush1.msra.mxu0 0.0
        %352 = vmatprep.subr.mxu0 0.0
        %353 = vmatpush1.msra.mxu0 0.0
        %354 = vmatprep.subr.mxu0 0.0
        %355 = vmatpush1.msra.mxu0 0.0
        %356 = vmatprep.subr.mxu0 0.0
        %357 = vmatpush1.msra.mxu0 0.0
        %358 = vmatprep.subr.mxu0 0.0
        %359 = vmatpush1.msra.mxu0 0.0
        %360 = vmatprep.subr.mxu0 0.0
        %361 = vmatpush1.msra.mxu0 0.0
        %362 = vmatprep.subr.mxu0 0.0
        %363 = vmatpush1.msra.mxu0 0.0
        %364 = vmatprep.subr.mxu0 0.0
        %365 = vmatpush1.msra.mxu0 0.0
        %366 = vmatprep.subr.mxu0 0.0
        %367 = vmatpush1.msra.mxu0 0.0
        %368 = vmatprep.subr.mxu0 0.0
        %369 = vmatpush1.msra.mxu0 0.0
        %370 = vmatprep.subr.mxu0 0.0
        %371 = vmatpush1.msra.mxu0 0.0
        %372 = vmatprep.mubr.f32.mxu0 0.0
        %373 = vmatmul.mubr.f32.gmra.mrb[0].mxu0 %v306
        %v374 = vpop.f32.mrb[0].mxu0
        %v375 = vadd.f32 %v302, %v374
        %v376 = vpop.f32.mrb[0].mxu0
        %v377 = vadd.f32 %v302, %v376
        %378 = vdwg.mxu0
        %vm379 = vcmp.ge.f32.partialorder %v375, 0.0
        %vm380 = vcmp.ge.f32.partialorder %v377, 0.0
        %v381 = vmul.f32 %v375, 0.01
        %v382 = vmul.f32 %v377, 0.01
        %v383 = vsel %vm379, %v375, %v381
        %v384 = vsel %vm380, %v377, %v382
        %385 = vst [vmem:[#allocation2] sm:$0xff] 0.0
        %386 = vst [vmem:[#allocation2 + $0x8] sm:$0xff] 0.0
        %387 = vst [vmem:[#allocation2 + $0x10] sm:$0xff] 0.0
        %vm388 = vcmask 818176
        %389 = vst.msk [vmem:[#allocation2 + $0x18] sm:$0xff] %vm388, 0.0
        %391 = vrot.lane.b32.xlu0 %v383, 84
        %v392 = vpop.permute.xlu0 %391
        %vm394 = vcmask 818848
        %395 = vst.msk [vmem:[#allocation2] sm:$0xff] %vm394, %v392
        %396 = vrot.lane.b32.xlu0 %v383, 88
        %v397 = vpop.permute.xlu0 %396
        %vm399 = vcmask 982848
        %400 = vst.msk [vmem:[#allocation2] sm:$0xff] %vm399, %v397
        %401 = vrot.lane.b32.xlu0 %v383, 92
        %v402 = vpop.permute.xlu0 %401
        %vm404 = vcmask 1048544
        %405 = vst.msk [vmem:[#allocation2] sm:$0xff] %vm404, %v402
        %vm406 = vcmask 97280
        %407 = vst.msk [vmem:[#allocation2 + $0x8] sm:$0xff] %vm406, %v402
        %408 = vrot.lane.b32.xlu0 %v383, 96
        %v409 = vpop.permute.xlu0 %408
        %vm411 = vcmask 261248
        %412 = vst.msk [vmem:[#allocation2 + $0x8] sm:$0xff] %vm411, %v409
        %413 = vrot.lane.b32.xlu0 %v383, 100
        %v414 = vpop.permute.xlu0 %413
        %vm416 = vcmask 425248
        %417 = vst.msk [vmem:[#allocation2 + $0x8] sm:$0xff] %vm416, %v414
        %418 = vrot.lane.b32.xlu0 %v383, 104
        %v419 = vpop.permute.xlu0 %418
        %vm421 = vcmask 589248
        %422 = vst.msk [vmem:[#allocation2 + $0x8] sm:$0xff] %vm421, %v419
        %423 = vrot.lane.b32.xlu0 %v383, 108
        %v424 = vpop.permute.xlu0 %423
        %vm426 = vcmask 753248
        %427 = vst.msk [vmem:[#allocation2 + $0x8] sm:$0xff] %vm426, %v424
        %428 = vrot.lane.b32.xlu0 %v383, 112
        %v429 = vpop.permute.xlu0 %428
        %vm431 = vcmask 917248
        %432 = vst.msk [vmem:[#allocation2 + $0x8] sm:$0xff] %vm431, %v429
        %434 = vrot.lane.b32.xlu0 %v384, 116
        %v435 = vpop.permute.xlu0 %434
        %vm437 = vcmask 1048480
        %438 = vst.msk [vmem:[#allocation2 + $0x8] sm:$0xff] %vm437, %v435
        %vm439 = vcmask 31744
        %440 = vst.msk [vmem:[#allocation2 + $0x10] sm:$0xff] %vm439, %v435
        %441 = vrot.lane.b32.xlu0 %v384, 120
        %v442 = vpop.permute.xlu0 %441
        %vm444 = vcmask 195648
        %445 = vst.msk [vmem:[#allocation2 + $0x10] sm:$0xff] %vm444, %v442
        %446 = vrot.lane.b32.xlu0 %v384, 124
        %v447 = vpop.permute.xlu0 %446
        %vm449 = vcmask 359648
        %450 = vst.msk [vmem:[#allocation2 + $0x10] sm:$0xff] %vm449, %v447
        %vm451 = vcmask 523648
        %452 = vst.msk [vmem:[#allocation2 + $0x10] sm:$0xff] %vm451, %v384
        %453 = vrot.lane.b32.xlu0 %v384, 4
        %v454 = vpop.permute.xlu0 %453
        %vm456 = vcmask 687648
        %457 = vst.msk [vmem:[#allocation2 + $0x10] sm:$0xff] %vm456, %v454
        %458 = vrot.lane.b32.xlu0 %v384, 8
        %v459 = vpop.permute.xlu0 %458
        %vm461 = vcmask 851648
        %462 = vst.msk [vmem:[#allocation2 + $0x10] sm:$0xff] %vm461, %v459
        %463 = vrot.lane.b32.xlu0 %v384, 12
        %v464 = vpop.permute.xlu0 %463
        %vm466 = vcmask 1015648
        %467 = vst.msk [vmem:[#allocation2 + $0x10] sm:$0xff] %vm466, %v464
        %468 = vrot.lane.b32.xlu0 %v384, 16
        %v469 = vpop.permute.xlu0 %468
        %vm471 = vcmask 130048
        %472 = vst.msk [vmem:[#allocation2 + $0x18] sm:$0xff] %vm471, %v469
        %v473 = vld [vmem:[#allocation2] sm:$0xff]
        %v474 = vld [vmem:[#allocation2 + $0x8] sm:$0xff]
        %v475 = vld [vmem:[#allocation2 + $0x10] sm:$0xff]
        %v476 = vld [vmem:[#allocation2 + $0x18] sm:$0xff]
        %477 = vst [vmem:[#allocation3] sm:$0xff] %v473
        %478 = vst [vmem:[#allocation3 + $0x8] sm:$0xff] %v474
        %479 = vst [vmem:[#allocation3 + $0x10] sm:$0xff] %v475
        %480 = vst.msk [vmem:[#allocation3 + $0x18] sm:$0xff] %vm471, %v476
        %v481 = vld [vmem:[#allocation2] sm:$0xff]
        %v482 = vld [vmem:[#allocation2 + $0x8] sm:$0xff]
        %v483 = vld [vmem:[#allocation2 + $0x10] sm:$0xff]
        %v484 = vld [vmem:[#allocation2 + $0x18] sm:$0xff]
        %489 = vrot.lane.b32.xlu0 %v481, 127
        %v490 = vpop.permute.xlu0 %489
        %491 = vrot.lane.b32.xlu0 %v482, 127
        %v492 = vpop.permute.xlu0 %491
        %493 = vrot.lane.b32.xlu0 %v483, 127
        %v494 = vpop.permute.xlu0 %493
        %495 = vrot.lane.b32.xlu0 %v484, 127
        %v496 = vpop.permute.xlu0 %495
        %vm497 = vcmask 1039360
        %v498 = vsel %vm497, %v490, %v492
        %v499 = vsel %vm497, %v492, %v494
        %v500 = vsel %vm497, %v494, %v496
        %505 = vst [vmem:[#allocation3 + $0x20] sm:$0xff] %v498
        %506 = vst [vmem:[#allocation3 + $0x28] sm:$0xff] %v499
        %507 = vst [vmem:[#allocation3 + $0x30] sm:$0xff] %v500
        %508 = vst.msk [vmem:[#allocation3 + $0x38] sm:$0xff] %vm471, %v496
        %v509 = vld [vmem:[#allocation2] sm:$0xff]
        %v510 = vld [vmem:[#allocation2 + $0x8] sm:$0xff]
        %v511 = vld [vmem:[#allocation2 + $0x10] sm:$0xff]
        %v512 = vld [vmem:[#allocation2 + $0x18] sm:$0xff]
        %517 = vrot.lane.b32.xlu0 %v509, 126
        %v518 = vpop.permute.xlu0 %517
        %519 = vrot.lane.b32.xlu0 %v510, 126
        %v520 = vpop.permute.xlu0 %519
        %521 = vrot.lane.b32.xlu0 %v511, 126
        %v522 = vpop.permute.xlu0 %521
        %523 = vrot.lane.b32.xlu0 %v512, 126
        %v524 = vpop.permute.xlu0 %523
        %vm525 = vcmask 1031168
        %v526 = vsel %vm525, %v518, %v520
        %v527 = vsel %vm525, %v520, %v522
        %v528 = vsel %vm525, %v522, %v524
        %533 = vst [vmem:[#allocation3 + $0x40] sm:$0xff] %v526
        %534 = vst [vmem:[#allocation3 + $0x48] sm:$0xff] %v527
        %535 = vst [vmem:[#allocation3 + $0x50] sm:$0xff] %v528
        %536 = vst.msk [vmem:[#allocation3 + $0x58] sm:$0xff] %vm471, %v524
        %v537 = vld [vmem:[#allocation2] sm:$0xff]
        %v538 = vld [vmem:[#allocation2 + $0x8] sm:$0xff]
        %v539 = vld [vmem:[#allocation2 + $0x10] sm:$0xff]
        %v540 = vld [vmem:[#allocation2 + $0x18] sm:$0xff]
        %545 = vrot.lane.b32.xlu0 %v537, 125
        %v546 = vpop.permute.xlu0 %545
        %547 = vrot.lane.b32.xlu0 %v538, 125
        %v548 = vpop.permute.xlu0 %547
        %549 = vrot.lane.b32.xlu0 %v539, 125
        %v550 = vpop.permute.xlu0 %549
        %551 = vrot.lane.b32.xlu0 %v540, 125
        %v552 = vpop.permute.xlu0 %551
        %vm553 = vcmask 1022976
        %v554 = vsel %vm553, %v546, %v548
        %v555 = vsel %vm553, %v548, %v550
        %v556 = vsel %vm553, %v550, %v552
        %561 = vst [vmem:[#allocation3 + $0x60] sm:$0xff] %v554
        %562 = vst [vmem:[#allocation3 + $0x68] sm:$0xff] %v555
        %563 = vst [vmem:[#allocation3 + $0x70] sm:$0xff] %v556
        %564 = vst.msk [vmem:[#allocation3 + $0x78] sm:$0xff] %vm471, %v552
        %v565 = vld [vmem:[#allocation2] sm:$0xff]
        %v566 = vld [vmem:[#allocation2 + $0x8] sm:$0xff]
        %v567 = vld [vmem:[#allocation2 + $0x10] sm:$0xff]
        %v568 = vld [vmem:[#allocation2 + $0x18] sm:$0xff]
        %573 = vrot.lane.b32.xlu0 %v565, 124
        %v574 = vpop.permute.xlu0 %573
        %575 = vrot.lane.b32.xlu0 %v566, 124
        %v576 = vpop.permute.xlu0 %575
        %577 = vrot.lane.b32.xlu0 %v567, 124
        %v578 = vpop.permute.xlu0 %577
        %579 = vrot.lane.b32.xlu0 %v568, 124
        %v580 = vpop.permute.xlu0 %579
        %vm581 = vcmask 1014784
        %v582 = vsel %vm581, %v574, %v576
        %v583 = vsel %vm581, %v576, %v578
        %v584 = vsel %vm581, %v578, %v580
        %589 = vst [vmem:[#allocation3 + $0x80] sm:$0xff] %v582
        %590 = vst [vmem:[#allocation3 + $0x88] sm:$0xff] %v583
        %591 = vst [vmem:[#allocation3 + $0x90] sm:$0xff] %v584
        %592 = vst.msk [vmem:[#allocation3 + $0x98] sm:$0xff] %vm471, %v580
        %v593 = vld [vmem:[#allocation2] sm:$0xff]
        %v594 = vld [vmem:[#allocation2 + $0x8] sm:$0xff]
        %v595 = vld [vmem:[#allocation2 + $0x10] sm:$0xff]
        %v596 = vld [vmem:[#allocation2 + $0x18] sm:$0xff]
        %601 = vrot.lane.b32.xlu0 %v593, 108
        %v602 = vpop.permute.xlu0 %601
        %603 = vrot.lane.b32.xlu0 %v594, 108
        %v604 = vpop.permute.xlu0 %603
        %605 = vrot.lane.b32.xlu0 %v595, 108
        %v606 = vpop.permute.xlu0 %605
        %607 = vrot.lane.b32.xlu0 %v596, 108
        %v608 = vpop.permute.xlu0 %607
        %vm609 = vcmask 883712
        %v610 = vsel %vm609, %v602, %v604
        %v611 = vsel %vm609, %v604, %v606
        %v612 = vsel %vm609, %v606, %v608
        %617 = vst [vmem:[#allocation3 + $0xa0] sm:$0xff] %v610
        %618 = vst [vmem:[#allocation3 + $0xa8] sm:$0xff] %v611
        %619 = vst [vmem:[#allocation3 + $0xb0] sm:$0xff] %v612
        %620 = vst.msk [vmem:[#allocation3 + $0xb8] sm:$0xff] %vm471, %v608
        %v621 = vld [vmem:[#allocation2] sm:$0xff]
        %v622 = vld [vmem:[#allocation2 + $0x8] sm:$0xff]
        %v623 = vld [vmem:[#allocation2 + $0x10] sm:$0xff]
        %v624 = vld [vmem:[#allocation2 + $0x18] sm:$0xff]
        %629 = vrot.lane.b32.xlu0 %v621, 107
        %v630 = vpop.permute.xlu0 %629
        %631 = vrot.lane.b32.xlu0 %v622, 107
        %v632 = vpop.permute.xlu0 %631
        %633 = vrot.lane.b32.xlu0 %v623, 107
        %v634 = vpop.permute.xlu0 %633
        %635 = vrot.lane.b32.xlu0 %v624, 107
        %v636 = vpop.permute.xlu0 %635
        %vm637 = vcmask 875520
        %v638 = vsel %vm637, %v630, %v632
        %v639 = vsel %vm637, %v632, %v634
        %v640 = vsel %vm637, %v634, %v636
        %645 = vst [vmem:[#allocation3 + $0xc0] sm:$0xff] %v638
        %646 = vst [vmem:[#allocation3 + $0xc8] sm:$0xff] %v639
        %647 = vst [vmem:[#allocation3 + $0xd0] sm:$0xff] %v640
        %648 = vst.msk [vmem:[#allocation3 + $0xd8] sm:$0xff] %vm471, %v636
        %v649 = vld [vmem:[#allocation2] sm:$0xff]
        %v650 = vld [vmem:[#allocation2 + $0x8] sm:$0xff]
        %v651 = vld [vmem:[#allocation2 + $0x10] sm:$0xff]
        %v652 = vld [vmem:[#allocation2 + $0x18] sm:$0xff]
        %657 = vrot.lane.b32.xlu0 %v649, 106
        %v658 = vpop.permute.xlu0 %657
        %659 = vrot.lane.b32.xlu0 %v650, 106
        %v660 = vpop.permute.xlu0 %659
        %661 = vrot.lane.b32.xlu0 %v651, 106
        %v662 = vpop.permute.xlu0 %661
        %663 = vrot.lane.b32.xlu0 %v652, 106
        %v664 = vpop.permute.xlu0 %663
        %vm665 = vcmask 867328
        %v666 = vsel %vm665, %v658, %v660
        %v667 = vsel %vm665, %v660, %v662
        %v668 = vsel %vm665, %v662, %v664
        %673 = vst [vmem:[#allocation3 + $0xe0] sm:$0xff] %v666
        %674 = vst [vmem:[#allocation3 + $0xe8] sm:$0xff] %v667
        %675 = vst [vmem:[#allocation3 + $0xf0] sm:$0xff] %v668
        %676 = vst.msk [vmem:[#allocation3 + $0xf8] sm:$0xff] %vm471, %v664
        %v677 = vld [vmem:[#allocation2] sm:$0xff]
        %v678 = vld [vmem:[#allocation2 + $0x8] sm:$0xff]
        %v679 = vld [vmem:[#allocation2 + $0x10] sm:$0xff]
        %v680 = vld [vmem:[#allocation2 + $0x18] sm:$0xff]
        %685 = vrot.lane.b32.xlu0 %v677, 105
        %v686 = vpop.permute.xlu0 %685
        %687 = vrot.lane.b32.xlu0 %v678, 105
        %v688 = vpop.permute.xlu0 %687
        %689 = vrot.lane.b32.xlu0 %v679, 105
        %v690 = vpop.permute.xlu0 %689
        %691 = vrot.lane.b32.xlu0 %v680, 105
        %v692 = vpop.permute.xlu0 %691
        %vm693 = vcmask 859136
        %v694 = vsel %vm693, %v686, %v688
        %v695 = vsel %vm693, %v688, %v690
        %v696 = vsel %vm693, %v690, %v692
        %701 = vst [vmem:[#allocation3 + $0x100] sm:$0xff] %v694
        %702 = vst [vmem:[#allocation3 + $0x108] sm:$0xff] %v695
        %703 = vst [vmem:[#allocation3 + $0x110] sm:$0xff] %v696
        %704 = vst.msk [vmem:[#allocation3 + $0x118] sm:$0xff] %vm471, %v692
        %v705 = vld [vmem:[#allocation2] sm:$0xff]
        %v706 = vld [vmem:[#allocation2 + $0x8] sm:$0xff]
        %v707 = vld [vmem:[#allocation2 + $0x10] sm:$0xff]
        %v708 = vld [vmem:[#allocation2 + $0x18] sm:$0xff]
        %713 = vrot.lane.b32.xlu0 %v705, 104
        %v714 = vpop.permute.xlu0 %713
        %715 = vrot.lane.b32.xlu0 %v706, 104
        %v716 = vpop.permute.xlu0 %715
        %717 = vrot.lane.b32.xlu0 %v707, 104
        %v718 = vpop.permute.xlu0 %717
        %719 = vrot.lane.b32.xlu0 %v708, 104
        %v720 = vpop.permute.xlu0 %719
        %vm721 = vcmask 850944
        %v722 = vsel %vm721, %v714, %v716
        %v723 = vsel %vm721, %v716, %v718
        %v724 = vsel %vm721, %v718, %v720
        %729 = vst [vmem:[#allocation3 + $0x120] sm:$0xff] %v722
        %730 = vst [vmem:[#allocation3 + $0x128] sm:$0xff] %v723
        %731 = vst [vmem:[#allocation3 + $0x130] sm:$0xff] %v724
        %732 = vst.msk [vmem:[#allocation3 + $0x138] sm:$0xff] %vm471, %v720
        %v733 = vld [vmem:[#allocation2] sm:$0xff]
        %v734 = vld [vmem:[#allocation2 + $0x8] sm:$0xff]
        %v735 = vld [vmem:[#allocation2 + $0x10] sm:$0xff]
        %v736 = vld [vmem:[#allocation2 + $0x18] sm:$0xff]
        %741 = vrot.lane.b32.xlu0 %v733, 88
        %v742 = vpop.permute.xlu0 %741
        %743 = vrot.lane.b32.xlu0 %v734, 88
        %v744 = vpop.permute.xlu0 %743
        %745 = vrot.lane.b32.xlu0 %v735, 88
        %v746 = vpop.permute.xlu0 %745
        %747 = vrot.lane.b32.xlu0 %v736, 88
        %v748 = vpop.permute.xlu0 %747
        %vm749 = vcmask 719872
        %v750 = vsel %vm749, %v742, %v744
        %v751 = vsel %vm749, %v744, %v746
        %v752 = vsel %vm749, %v746, %v748
        %757 = vst [vmem:[#allocation3 + $0x140] sm:$0xff] %v750
        %758 = vst [vmem:[#allocation3 + $0x148] sm:$0xff] %v751
        %759 = vst [vmem:[#allocation3 + $0x150] sm:$0xff] %v752
        %760 = vst.msk [vmem:[#allocation3 + $0x158] sm:$0xff] %vm471, %v748
        %v761 = vld [vmem:[#allocation2] sm:$0xff]
        %v762 = vld [vmem:[#allocation2 + $0x8] sm:$0xff]
        %v763 = vld [vmem:[#allocation2 + $0x10] sm:$0xff]
        %v764 = vld [vmem:[#allocation2 + $0x18] sm:$0xff]
        %769 = vrot.lane.b32.xlu0 %v761, 87
        %v770 = vpop.permute.xlu0 %769
        %771 = vrot.lane.b32.xlu0 %v762, 87
        %v772 = vpop.permute.xlu0 %771
        %773 = vrot.lane.b32.xlu0 %v763, 87
        %v774 = vpop.permute.xlu0 %773
        %775 = vrot.lane.b32.xlu0 %v764, 87
        %v776 = vpop.permute.xlu0 %775
        %vm777 = vcmask 711680
        %v778 = vsel %vm777, %v770, %v772
        %v779 = vsel %vm777, %v772, %v774
        %v780 = vsel %vm777, %v774, %v776
        %785 = vst [vmem:[#allocation3 + $0x160] sm:$0xff] %v778
        %786 = vst [vmem:[#allocation3 + $0x168] sm:$0xff] %v779
        %787 = vst [vmem:[#allocation3 + $0x170] sm:$0xff] %v780
        %788 = vst.msk [vmem:[#allocation3 + $0x178] sm:$0xff] %vm471, %v776
        %v789 = vld [vmem:[#allocation2] sm:$0xff]
        %v790 = vld [vmem:[#allocation2 + $0x8] sm:$0xff]
        %v791 = vld [vmem:[#allocation2 + $0x10] sm:$0xff]
        %v792 = vld [vmem:[#allocation2 + $0x18] sm:$0xff]
        %797 = vrot.lane.b32.xlu0 %v789, 86
        %v798 = vpop.permute.xlu0 %797
        %799 = vrot.lane.b32.xlu0 %v790, 86
        %v800 = vpop.permute.xlu0 %799
        %801 = vrot.lane.b32.xlu0 %v791, 86
        %v802 = vpop.permute.xlu0 %801
        %803 = vrot.lane.b32.xlu0 %v792, 86
        %v804 = vpop.permute.xlu0 %803
        %vm805 = vcmask 703488
        %v806 = vsel %vm805, %v798, %v800
        %v807 = vsel %vm805, %v800, %v802
        %v808 = vsel %vm805, %v802, %v804
        %813 = vst [vmem:[#allocation3 + $0x180] sm:$0xff] %v806
        %814 = vst [vmem:[#allocation3 + $0x188] sm:$0xff] %v807
        %815 = vst [vmem:[#allocation3 + $0x190] sm:$0xff] %v808
        %816 = vst.msk [vmem:[#allocation3 + $0x198] sm:$0xff] %vm471, %v804
        %v817 = vld [vmem:[#allocation2] sm:$0xff]
        %v818 = vld [vmem:[#allocation2 + $0x8] sm:$0xff]
        %v819 = vld [vmem:[#allocation2 + $0x10] sm:$0xff]
        %v820 = vld [vmem:[#allocation2 + $0x18] sm:$0xff]
        %825 = vrot.lane.b32.xlu0 %v817, 85
        %v826 = vpop.permute.xlu0 %825
        %827 = vrot.lane.b32.xlu0 %v818, 85
        %v828 = vpop.permute.xlu0 %827
        %829 = vrot.lane.b32.xlu0 %v819, 85
        %v830 = vpop.permute.xlu0 %829
        %831 = vrot.lane.b32.xlu0 %v820, 85
        %v832 = vpop.permute.xlu0 %831
        %vm833 = vcmask 695296
        %v834 = vsel %vm833, %v826, %v828
        %v835 = vsel %vm833, %v828, %v830
        %v836 = vsel %vm833, %v830, %v832
        %841 = vst [vmem:[#allocation3 + $0x1a0] sm:$0xff] %v834
        %842 = vst [vmem:[#allocation3 + $0x1a8] sm:$0xff] %v835
        %843 = vst [vmem:[#allocation3 + $0x1b0] sm:$0xff] %v836
        %844 = vst.msk [vmem:[#allocation3 + $0x1b8] sm:$0xff] %vm471, %v832
        %v845 = vld [vmem:[#allocation2] sm:$0xff]
        %v846 = vld [vmem:[#allocation2 + $0x8] sm:$0xff]
        %v847 = vld [vmem:[#allocation2 + $0x10] sm:$0xff]
        %v848 = vld [vmem:[#allocation2 + $0x18] sm:$0xff]
        %853 = vrot.lane.b32.xlu0 %v845, 84
        %v854 = vpop.permute.xlu0 %853
        %855 = vrot.lane.b32.xlu0 %v846, 84
        %v856 = vpop.permute.xlu0 %855
        %857 = vrot.lane.b32.xlu0 %v847, 84
        %v858 = vpop.permute.xlu0 %857
        %859 = vrot.lane.b32.xlu0 %v848, 84
        %v860 = vpop.permute.xlu0 %859
        %vm861 = vcmask 687104
        %v862 = vsel %vm861, %v854, %v856
        %v863 = vsel %vm861, %v856, %v858
        %v864 = vsel %vm861, %v858, %v860
        %869 = vst [vmem:[#allocation3 + $0x1c0] sm:$0xff] %v862
        %870 = vst [vmem:[#allocation3 + $0x1c8] sm:$0xff] %v863
        %871 = vst [vmem:[#allocation3 + $0x1d0] sm:$0xff] %v864
        %872 = vst.msk [vmem:[#allocation3 + $0x1d8] sm:$0xff] %vm471, %v860
        %v873 = vld [vmem:[#allocation2] sm:$0xff]
        %v874 = vld [vmem:[#allocation2 + $0x8] sm:$0xff]
        %v875 = vld [vmem:[#allocation2 + $0x10] sm:$0xff]
        %v876 = vld [vmem:[#allocation2 + $0x18] sm:$0xff]
        %881 = vrot.lane.b32.xlu0 %v873, 68
        %v882 = vpop.permute.xlu0 %881
        %883 = vrot.lane.b32.xlu0 %v874, 68
        %v884 = vpop.permute.xlu0 %883
        %885 = vrot.lane.b32.xlu0 %v875, 68
        %v886 = vpop.permute.xlu0 %885
        %887 = vrot.lane.b32.xlu0 %v876, 68
        %v888 = vpop.permute.xlu0 %887
        %vm889 = vcmask 556032
        %v890 = vsel %vm889, %v882, %v884
        %v891 = vsel %vm889, %v884, %v886
        %v892 = vsel %vm889, %v886, %v888
        %897 = vst [vmem:[#allocation3 + $0x1e0] sm:$0xff] %v890
        %898 = vst [vmem:[#allocation3 + $0x1e8] sm:$0xff] %v891
        %899 = vst [vmem:[#allocation3 + $0x1f0] sm:$0xff] %v892
        %900 = vst.msk [vmem:[#allocation3 + $0x1f8] sm:$0xff] %vm471, %v888
        %v901 = vld [vmem:[#allocation2] sm:$0xff]
        %v902 = vld [vmem:[#allocation2 + $0x8] sm:$0xff]
        %v903 = vld [vmem:[#allocation2 + $0x10] sm:$0xff]
        %v904 = vld [vmem:[#allocation2 + $0x18] sm:$0xff]
        %909 = vrot.lane.b32.xlu0 %v901, 67
        %v910 = vpop.permute.xlu0 %909
        %911 = vrot.lane.b32.xlu0 %v902, 67
        %v912 = vpop.permute.xlu0 %911
        %913 = vrot.lane.b32.xlu0 %v903, 67
        %v914 = vpop.permute.xlu0 %913
        %915 = vrot.lane.b32.xlu0 %v904, 67
        %v916 = vpop.permute.xlu0 %915
        %vm917 = vcmask 547840
        %v918 = vsel %vm917, %v910, %v912
        %v919 = vsel %vm917, %v912, %v914
        %v920 = vsel %vm917, %v914, %v916
        %925 = vst [vmem:[#allocation3 + $0x200] sm:$0xff] %v918
        %926 = vst [vmem:[#allocation3 + $0x208] sm:$0xff] %v919
        %927 = vst [vmem:[#allocation3 + $0x210] sm:$0xff] %v920
        %928 = vst.msk [vmem:[#allocation3 + $0x218] sm:$0xff] %vm471, %v916
        %v929 = vld [vmem:[#allocation2] sm:$0xff]
        %v930 = vld [vmem:[#allocation2 + $0x8] sm:$0xff]
        %v931 = vld [vmem:[#allocation2 + $0x10] sm:$0xff]
        %v932 = vld [vmem:[#allocation2 + $0x18] sm:$0xff]
        %937 = vrot.lane.b32.xlu0 %v929, 66
        %v938 = vpop.permute.xlu0 %937
        %939 = vrot.lane.b32.xlu0 %v930, 66
        %v940 = vpop.permute.xlu0 %939
        %941 = vrot.lane.b32.xlu0 %v931, 66
        %v942 = vpop.permute.xlu0 %941
        %943 = vrot.lane.b32.xlu0 %v932, 66
        %v944 = vpop.permute.xlu0 %943
        %vm945 = vcmask 539648
        %v946 = vsel %vm945, %v938, %v940
        %v947 = vsel %vm945, %v940, %v942
        %v948 = vsel %vm945, %v942, %v944
        %953 = vst [vmem:[#allocation3 + $0x220] sm:$0xff] %v946
        %954 = vst [vmem:[#allocation3 + $0x228] sm:$0xff] %v947
        %955 = vst [vmem:[#allocation3 + $0x230] sm:$0xff] %v948
        %956 = vst.msk [vmem:[#allocation3 + $0x238] sm:$0xff] %vm471, %v944
        %v957 = vld [vmem:[#allocation2] sm:$0xff]
        %v958 = vld [vmem:[#allocation2 + $0x8] sm:$0xff]
        %v959 = vld [vmem:[#allocation2 + $0x10] sm:$0xff]
        %v960 = vld [vmem:[#allocation2 + $0x18] sm:$0xff]
        %965 = vrot.lane.b32.xlu0 %v957, 65
        %v966 = vpop.permute.xlu0 %965
        %967 = vrot.lane.b32.xlu0 %v958, 65
        %v968 = vpop.permute.xlu0 %967
        %969 = vrot.lane.b32.xlu0 %v959, 65
        %v970 = vpop.permute.xlu0 %969
        %971 = vrot.lane.b32.xlu0 %v960, 65
        %v972 = vpop.permute.xlu0 %971
        %vm973 = vcmask 531456
        %v974 = vsel %vm973, %v966, %v968
        %v975 = vsel %vm973, %v968, %v970
        %v976 = vsel %vm973, %v970, %v972
        %981 = vst [vmem:[#allocation3 + $0x240] sm:$0xff] %v974
        %982 = vst [vmem:[#allocation3 + $0x248] sm:$0xff] %v975
        %983 = vst [vmem:[#allocation3 + $0x250] sm:$0xff] %v976
        %984 = vst.msk [vmem:[#allocation3 + $0x258] sm:$0xff] %vm471, %v972
        %v985 = vld [vmem:[#allocation2] sm:$0xff]
        %v986 = vld [vmem:[#allocation2 + $0x8] sm:$0xff]
        %v987 = vld [vmem:[#allocation2 + $0x10] sm:$0xff]
        %v988 = vld [vmem:[#allocation2 + $0x18] sm:$0xff]
        %993 = vrot.lane.b32.xlu0 %v985, 64
        %v994 = vpop.permute.xlu0 %993
        %995 = vrot.lane.b32.xlu0 %v986, 64
        %v996 = vpop.permute.xlu0 %995
        %997 = vrot.lane.b32.xlu0 %v987, 64
        %v998 = vpop.permute.xlu0 %997
        %999 = vrot.lane.b32.xlu0 %v988, 64
        %v1000 = vpop.permute.xlu0 %999
        %vm1001 = vcmask 523264
        %v1002 = vsel %vm1001, %v994, %v996
        %v1003 = vsel %vm1001, %v996, %v998
        %v1004 = vsel %vm1001, %v998, %v1000
        %1009 = vst [vmem:[#allocation3 + $0x260] sm:$0xff] %v1002
        %1010 = vst [vmem:[#allocation3 + $0x268] sm:$0xff] %v1003
        %1011 = vst [vmem:[#allocation3 + $0x270] sm:$0xff] %v1004
        %1012 = vst.msk [vmem:[#allocation3 + $0x278] sm:$0xff] %vm471, %v1000
        %v1013 = vld [vmem:[#allocation2] sm:$0xff]
        %v1014 = vld [vmem:[#allocation2 + $0x8] sm:$0xff]
        %v1015 = vld [vmem:[#allocation2 + $0x10] sm:$0xff]
        %v1016 = vld [vmem:[#allocation2 + $0x18] sm:$0xff]
        %1021 = vrot.lane.b32.xlu0 %v1013, 48
        %v1022 = vpop.permute.xlu0 %1021
        %1023 = vrot.lane.b32.xlu0 %v1014, 48
        %v1024 = vpop.permute.xlu0 %1023
        %1025 = vrot.lane.b32.xlu0 %v1015, 48
        %v1026 = vpop.permute.xlu0 %1025
        %1027 = vrot.lane.b32.xlu0 %v1016, 48
        %v1028 = vpop.permute.xlu0 %1027
        %vm1029 = vcmask 392192
        %v1030 = vsel %vm1029, %v1022, %v1024
        %v1031 = vsel %vm1029, %v1024, %v1026
        %v1032 = vsel %vm1029, %v1026, %v1028
        %1037 = vst [vmem:[#allocation3 + $0x280] sm:$0xff] %v1030
        %1038 = vst [vmem:[#allocation3 + $0x288] sm:$0xff] %v1031
        %1039 = vst [vmem:[#allocation3 + $0x290] sm:$0xff] %v1032
        %1040 = vst.msk [vmem:[#allocation3 + $0x298] sm:$0xff] %vm471, %v1028
        %v1041 = vld [vmem:[#allocation2] sm:$0xff]
        %v1042 = vld [vmem:[#allocation2 + $0x8] sm:$0xff]
        %v1043 = vld [vmem:[#allocation2 + $0x10] sm:$0xff]
        %v1044 = vld [vmem:[#allocation2 + $0x18] sm:$0xff]
        %1049 = vrot.lane.b32.xlu0 %v1041, 47
        %v1050 = vpop.permute.xlu0 %1049
        %1051 = vrot.lane.b32.xlu0 %v1042, 47
        %v1052 = vpop.permute.xlu0 %1051
        %1053 = vrot.lane.b32.xlu0 %v1043, 47
        %v1054 = vpop.permute.xlu0 %1053
        %1055 = vrot.lane.b32.xlu0 %v1044, 47
        %v1056 = vpop.permute.xlu0 %1055
        %vm1057 = vcmask 384000
        %v1058 = vsel %vm1057, %v1050, %v1052
        %v1059 = vsel %vm1057, %v1052, %v1054
        %v1060 = vsel %vm1057, %v1054, %v1056
        %1065 = vst [vmem:[#allocation3 + $0x2a0] sm:$0xff] %v1058
        %1066 = vst [vmem:[#allocation3 + $0x2a8] sm:$0xff] %v1059
        %1067 = vst [vmem:[#allocation3 + $0x2b0] sm:$0xff] %v1060
        %1068 = vst.msk [vmem:[#allocation3 + $0x2b8] sm:$0xff] %vm471, %v1056
        %v1069 = vld [vmem:[#allocation2] sm:$0xff]
        %v1070 = vld [vmem:[#allocation2 + $0x8] sm:$0xff]
        %v1071 = vld [vmem:[#allocation2 + $0x10] sm:$0xff]
        %v1072 = vld [vmem:[#allocation2 + $0x18] sm:$0xff]
        %1077 = vrot.lane.b32.xlu0 %v1069, 46
        %v1078 = vpop.permute.xlu0 %1077
        %1079 = vrot.lane.b32.xlu0 %v1070, 46
        %v1080 = vpop.permute.xlu0 %1079
        %1081 = vrot.lane.b32.xlu0 %v1071, 46
        %v1082 = vpop.permute.xlu0 %1081
        %1083 = vrot.lane.b32.xlu0 %v1072, 46
        %v1084 = vpop.permute.xlu0 %1083
        %vm1085 = vcmask 375808
        %v1086 = vsel %vm1085, %v1078, %v1080
        %v1087 = vsel %vm1085, %v1080, %v1082
        %v1088 = vsel %vm1085, %v1082, %v1084
        %1093 = vst [vmem:[#allocation3 + $0x2c0] sm:$0xff] %v1086
        %1094 = vst [vmem:[#allocation3 + $0x2c8] sm:$0xff] %v1087
        %1095 = vst [vmem:[#allocation3 + $0x2d0] sm:$0xff] %v1088
        %1096 = vst.msk [vmem:[#allocation3 + $0x2d8] sm:$0xff] %vm471, %v1084
        %v1097 = vld [vmem:[#allocation2] sm:$0xff]
        %v1098 = vld [vmem:[#allocation2 + $0x8] sm:$0xff]
        %v1099 = vld [vmem:[#allocation2 + $0x10] sm:$0xff]
        %v1100 = vld [vmem:[#allocation2 + $0x18] sm:$0xff]
        %1105 = vrot.lane.b32.xlu0 %v1097, 45
        %v1106 = vpop.permute.xlu0 %1105
        %1107 = vrot.lane.b32.xlu0 %v1098, 45
        %v1108 = vpop.permute.xlu0 %1107
        %1109 = vrot.lane.b32.xlu0 %v1099, 45
        %v1110 = vpop.permute.xlu0 %1109
        %1111 = vrot.lane.b32.xlu0 %v1100, 45
        %v1112 = vpop.permute.xlu0 %1111
        %vm1113 = vcmask 367616
        %v1114 = vsel %vm1113, %v1106, %v1108
        %v1115 = vsel %vm1113, %v1108, %v1110
        %v1116 = vsel %vm1113, %v1110, %v1112
        %1121 = vst [vmem:[#allocation3 + $0x2e0] sm:$0xff] %v1114
        %1122 = vst [vmem:[#allocation3 + $0x2e8] sm:$0xff] %v1115
        %1123 = vst [vmem:[#allocation3 + $0x2f0] sm:$0xff] %v1116
        %1124 = vst.msk [vmem:[#allocation3 + $0x2f8] sm:$0xff] %vm471, %v1112
        %v1125 = vld [vmem:[#allocation2] sm:$0xff]
        %v1126 = vld [vmem:[#allocation2 + $0x8] sm:$0xff]
        %v1127 = vld [vmem:[#allocation2 + $0x10] sm:$0xff]
        %v1128 = vld [vmem:[#allocation2 + $0x18] sm:$0xff]
        %1133 = vrot.lane.b32.xlu0 %v1125, 44
        %v1134 = vpop.permute.xlu0 %1133
        %1135 = vrot.lane.b32.xlu0 %v1126, 44
        %v1136 = vpop.permute.xlu0 %1135
        %1137 = vrot.lane.b32.xlu0 %v1127, 44
        %v1138 = vpop.permute.xlu0 %1137
        %1139 = vrot.lane.b32.xlu0 %v1128, 44
        %v1140 = vpop.permute.xlu0 %1139
        %vm1141 = vcmask 359424
        %v1142 = vsel %vm1141, %v1134, %v1136
        %v1143 = vsel %vm1141, %v1136, %v1138
        %v1144 = vsel %vm1141, %v1138, %v1140
        %1149 = vst [vmem:[#allocation3 + $0x300] sm:$0xff] %v1142
        %1150 = vst [vmem:[#allocation3 + $0x308] sm:$0xff] %v1143
        %1151 = vst [vmem:[#allocation3 + $0x310] sm:$0xff] %v1144
        %1152 = vst.msk [vmem:[#allocation3 + $0x318] sm:$0xff] %vm471, %v1140
        %v1153 = vld [vmem:[%s3] sm:$0xff]
        %v1154 = vld [vmem:[%s3 + $0x8] sm:$0xff]
        %v1155 = vld [vmem:[#allocation3] sm:$0xff]
        %v1156 = vld [vmem:[#allocation3 + $0x8] sm:$0xff]
        %v1157 = vld [vmem:[#allocation3 + $0x10] sm:$0xff]
        %v1158 = vld [vmem:[#allocation3 + $0x18] sm:$0xff]
        %v1159 = vld [vmem:[#allocation3 + $0x20] sm:$0xff]
        %v1160 = vld [vmem:[#allocation3 + $0x28] sm:$0xff]
        %v1161 = vld [vmem:[#allocation3 + $0x30] sm:$0xff]
        %v1162 = vld [vmem:[#allocation3 + $0x38] sm:$0xff]
        %v1163 = vld [vmem:[#allocation3 + $0x40] sm:$0xff]
        %v1164 = vld [vmem:[#allocation3 + $0x48] sm:$0xff]
        %v1165 = vld [vmem:[#allocation3 + $0x50] sm:$0xff]
        %v1166 = vld [vmem:[#allocation3 + $0x58] sm:$0xff]
        %v1167 = vld [vmem:[#allocation3 + $0x60] sm:$0xff]
        %v1168 = vld [vmem:[#allocation3 + $0x68] sm:$0xff]
        %v1169 = vld [vmem:[#allocation3 + $0x70] sm:$0xff]
        %v1170 = vld [vmem:[#allocation3 + $0x78] sm:$0xff]
        %v1171 = vld [vmem:[#allocation3 + $0x80] sm:$0xff]
        %v1172 = vld [vmem:[#allocation3 + $0x88] sm:$0xff]
        %v1173 = vld [vmem:[#allocation3 + $0x90] sm:$0xff]
        %v1174 = vld [vmem:[#allocation3 + $0x98] sm:$0xff]
        %v1175 = vld [vmem:[#allocation3 + $0xa0] sm:$0xff]
        %v1176 = vld [vmem:[#allocation3 + $0xa8] sm:$0xff]
        %v1177 = vld [vmem:[#allocation3 + $0xb0] sm:$0xff]
        %v1178 = vld [vmem:[#allocation3 + $0xb8] sm:$0xff]
        %v1179 = vld [vmem:[#allocation3 + $0xc0] sm:$0xff]
        %v1180 = vld [vmem:[#allocation3 + $0xc8] sm:$0xff]
        %v1181 = vld [vmem:[#allocation3 + $0xd0] sm:$0xff]
        %v1182 = vld [vmem:[#allocation3 + $0xd8] sm:$0xff]
        %v1183 = vld [vmem:[#allocation3 + $0xe0] sm:$0xff]
        %v1184 = vld [vmem:[#allocation3 + $0xe8] sm:$0xff]
        %v1185 = vld [vmem:[#allocation3 + $0xf0] sm:$0xff]
        %v1186 = vld [vmem:[#allocation3 + $0xf8] sm:$0xff]
        %v1187 = vld [vmem:[#allocation3 + $0x100] sm:$0xff]
        %v1188 = vld [vmem:[#allocation3 + $0x108] sm:$0xff]
        %v1189 = vld [vmem:[#allocation3 + $0x110] sm:$0xff]
        %v1190 = vld [vmem:[#allocation3 + $0x118] sm:$0xff]
        %v1191 = vld [vmem:[#allocation3 + $0x120] sm:$0xff]
        %v1192 = vld [vmem:[#allocation3 + $0x128] sm:$0xff]
        %v1193 = vld [vmem:[#allocation3 + $0x130] sm:$0xff]
        %v1194 = vld [vmem:[#allocation3 + $0x138] sm:$0xff]
        %v1195 = vld [vmem:[#allocation3 + $0x140] sm:$0xff]
        %v1196 = vld [vmem:[#allocation3 + $0x148] sm:$0xff]
        %v1197 = vld [vmem:[#allocation3 + $0x150] sm:$0xff]
        %v1198 = vld [vmem:[#allocation3 + $0x158] sm:$0xff]
        %v1199 = vld [vmem:[#allocation3 + $0x160] sm:$0xff]
        %v1200 = vld [vmem:[#allocation3 + $0x168] sm:$0xff]
        %v1201 = vld [vmem:[#allocation3 + $0x170] sm:$0xff]
        %v1202 = vld [vmem:[#allocation3 + $0x178] sm:$0xff]
        %v1203 = vld [vmem:[#allocation3 + $0x180] sm:$0xff]
        %v1204 = vld [vmem:[#allocation3 + $0x188] sm:$0xff]
        %v1205 = vld [vmem:[#allocation3 + $0x190] sm:$0xff]
        %v1206 = vld [vmem:[#allocation3 + $0x198] sm:$0xff]
        %v1207 = vld [vmem:[#allocation3 + $0x1a0] sm:$0xff]
        %v1208 = vld [vmem:[#allocation3 + $0x1a8] sm:$0xff]
        %v1209 = vld [vmem:[#allocation3 + $0x1b0] sm:$0xff]
        %v1210 = vld [vmem:[#allocation3 + $0x1b8] sm:$0xff]
        %v1211 = vld [vmem:[#allocation3 + $0x1c0] sm:$0xff]
        %v1212 = vld [vmem:[#allocation3 + $0x1c8] sm:$0xff]
        %v1213 = vld [vmem:[#allocation3 + $0x1d0] sm:$0xff]
        %v1214 = vld [vmem:[#allocation3 + $0x1d8] sm:$0xff]
        %v1215 = vld [vmem:[#allocation3 + $0x1e0] sm:$0xff]
        %v1216 = vld [vmem:[#allocation3 + $0x1e8] sm:$0xff]
        %v1217 = vld [vmem:[#allocation3 + $0x1f0] sm:$0xff]
        %v1218 = vld [vmem:[#allocation3 + $0x1f8] sm:$0xff]
        %v1219 = vld [vmem:[#allocation3 + $0x200] sm:$0xff]
        %v1220 = vld [vmem:[#allocation3 + $0x208] sm:$0xff]
        %v1221 = vld [vmem:[#allocation3 + $0x210] sm:$0xff]
        %v1222 = vld [vmem:[#allocation3 + $0x218] sm:$0xff]
        %v1223 = vld [vmem:[#allocation3 + $0x220] sm:$0xff]
        %v1224 = vld [vmem:[#allocation3 + $0x228] sm:$0xff]
        %v1225 = vld [vmem:[#allocation3 + $0x230] sm:$0xff]
        %v1226 = vld [vmem:[#allocation3 + $0x238] sm:$0xff]
        %v1227 = vld [vmem:[#allocation3 + $0x240] sm:$0xff]
        %v1228 = vld [vmem:[#allocation3 + $0x248] sm:$0xff]
        %v1229 = vld [vmem:[#allocation3 + $0x250] sm:$0xff]
        %v1230 = vld [vmem:[#allocation3 + $0x258] sm:$0xff]
        %v1231 = vld [vmem:[#allocation3 + $0x260] sm:$0xff]
        %v1232 = vld [vmem:[#allocation3 + $0x268] sm:$0xff]
        %v1233 = vld [vmem:[#allocation3 + $0x270] sm:$0xff]
        %v1234 = vld [vmem:[#allocation3 + $0x278] sm:$0xff]
        %v1235 = vld [vmem:[#allocation3 + $0x280] sm:$0xff]
        %v1236 = vld [vmem:[#allocation3 + $0x288] sm:$0xff]
        %v1237 = vld [vmem:[#allocation3 + $0x290] sm:$0xff]
        %v1238 = vld [vmem:[#allocation3 + $0x298] sm:$0xff]
        %v1239 = vld [vmem:[#allocation3 + $0x2a0] sm:$0xff]
        %v1240 = vld [vmem:[#allocation3 + $0x2a8] sm:$0xff]
        %v1241 = vld [vmem:[#allocation3 + $0x2b0] sm:$0xff]
        %v1242 = vld [vmem:[#allocation3 + $0x2b8] sm:$0xff]
        %v1243 = vld [vmem:[#allocation3 + $0x2c0] sm:$0xff]
        %v1244 = vld [vmem:[#allocation3 + $0x2c8] sm:$0xff]
        %v1245 = vld [vmem:[#allocation3 + $0x2d0] sm:$0xff]
        %v1246 = vld [vmem:[#allocation3 + $0x2d8] sm:$0xff]
        %v1247 = vld [vmem:[#allocation3 + $0x2e0] sm:$0xff]
        %v1248 = vld [vmem:[#allocation3 + $0x2e8] sm:$0xff]
        %v1249 = vld [vmem:[#allocation3 + $0x2f0] sm:$0xff]
        %v1250 = vld [vmem:[#allocation3 + $0x2f8] sm:$0xff]
        %v1251 = vld [vmem:[#allocation3 + $0x300] sm:$0xff]
        %v1252 = vld [vmem:[#allocation3 + $0x308] sm:$0xff]
        %v1253 = vld [vmem:[#allocation3 + $0x310] sm:$0xff]
        %v1254 = vld [vmem:[#allocation3 + $0x318] sm:$0xff]
        %v1255 = vld [vmem:[%s4] sm:$0xff]
        %1257 = vset.pattern.permute.xlu0 0
        %1258 = vperm.xlu0 %1257, %v1255
        %v1259 = vpop.permute.xlu0 %1258
        %vm1261 = vcmask 588800
        %v1263 = vsel %vm1261, %v1154, 0
        %1265 = vmatprep.subr.mxu0 %v1156
        %1266 = vmatpush1.msra.mxu0 %v1155
        %1267 = vmatprep.subr.mxu0 %v1160
        %1268 = vmatpush1.msra.mxu0 %v1159
        %1269 = vmatprep.subr.mxu0 %v1164
        %1270 = vmatpush1.msra.mxu0 %v1163
        %1271 = vmatprep.subr.mxu0 %v1168
        %1272 = vmatpush1.msra.mxu0 %v1167
        %1273 = vmatprep.subr.mxu0 %v1172
        %1274 = vmatpush1.msra.mxu0 %v1171
        %1275 = vmatprep.subr.mxu0 %v1176
        %1276 = vmatpush1.msra.mxu0 %v1175
        %1277 = vmatprep.subr.mxu0 %v1180
        %1278 = vmatpush1.msra.mxu0 %v1179
        %1279 = vmatprep.subr.mxu0 %v1184
        %1280 = vmatpush1.msra.mxu0 %v1183
        %1281 = vmatprep.subr.mxu0 %v1188
        %1282 = vmatpush1.msra.mxu0 %v1187
        %1283 = vmatprep.subr.mxu0 %v1192
        %1284 = vmatpush1.msra.mxu0 %v1191
        %1285 = vmatprep.subr.mxu0 %v1196
        %1286 = vmatpush1.msra.mxu0 %v1195
        %1287 = vmatprep.subr.mxu0 %v1200
        %1288 = vmatpush1.msra.mxu0 %v1199
        %1289 = vmatprep.subr.mxu0 %v1204
        %1290 = vmatpush1.msra.mxu0 %v1203
        %1291 = vmatprep.subr.mxu0 %v1208
        %1292 = vmatpush1.msra.mxu0 %v1207
        %1293 = vmatprep.subr.mxu0 %v1212
        %1294 = vmatpush1.msra.mxu0 %v1211
        %1295 = vmatprep.subr.mxu0 %v1216
        %1296 = vmatpush1.msra.mxu0 %v1215
        %1297 = vmatprep.subr.mxu0 %v1220
        %1298 = vmatpush1.msra.mxu0 %v1219
        %1299 = vmatprep.subr.mxu0 %v1224
        %1300 = vmatpush1.msra.mxu0 %v1223
        %1301 = vmatprep.subr.mxu0 %v1228
        %1302 = vmatpush1.msra.mxu0 %v1227
        %1303 = vmatprep.subr.mxu0 %v1232
        %1304 = vmatpush1.msra.mxu0 %v1231
        %1305 = vmatprep.subr.mxu0 %v1236
        %1306 = vmatpush1.msra.mxu0 %v1235
        %1307 = vmatprep.subr.mxu0 %v1240
        %1308 = vmatpush1.msra.mxu0 %v1239
        %1309 = vmatprep.subr.mxu0 %v1244
        %1310 = vmatpush1.msra.mxu0 %v1243
        %1311 = vmatprep.subr.mxu0 %v1248
        %1312 = vmatpush1.msra.mxu0 %v1247
        %1313 = vmatprep.subr.mxu0 %v1252
        %1314 = vmatpush1.msra.mxu0 %v1251
        %1315 = vmatprep.subr.mxu0 0.0
        %1316 = vmatpush1.msra.mxu0 0.0
        %1317 = vmatprep.subr.mxu0 0.0
        %1318 = vmatpush1.msra.mxu0 0.0
        %1319 = vmatprep.subr.mxu0 0.0
        %1320 = vmatpush1.msra.mxu0 0.0
        %1321 = vmatprep.subr.mxu0 0.0
        %1322 = vmatpush1.msra.mxu0 0.0
        %1323 = vmatprep.subr.mxu0 0.0
        %1324 = vmatpush1.msra.mxu0 0.0
        %1325 = vmatprep.subr.mxu0 0.0
        %1326 = vmatpush1.msra.mxu0 0.0
        %1327 = vmatprep.subr.mxu0 0.0
        %1328 = vmatpush1.msra.mxu0 0.0
        %1329 = vmatprep.mubr.f32.mxu0 %v1263
        %1330 = vmatmul.mubr.f32.gmra.mrb[0].mxu0 %v1153
        %v1331 = vpop.f32.mrb[0].mxu0
        %v1332 = vadd.f32 %v1259, %v1331
        %v1333 = vpop.f32.mrb[0].mxu0
        %v1334 = vadd.f32 %v1259, %v1333
        %1335 = vdwg.mxu0
        %1336 = vmatprep.subr.mxu0 %v1158
        %1337 = vmatpush1.msra.mxu0 %v1157
        %1338 = vmatprep.subr.mxu0 %v1162
        %1339 = vmatpush1.msra.mxu0 %v1161
        %1340 = vmatprep.subr.mxu0 %v1166
        %1341 = vmatpush1.msra.mxu0 %v1165
        %1342 = vmatprep.subr.mxu0 %v1170
        %1343 = vmatpush1.msra.mxu0 %v1169
        %1344 = vmatprep.subr.mxu0 %v1174
        %1345 = vmatpush1.msra.mxu0 %v1173
        %1346 = vmatprep.subr.mxu0 %v1178
        %1347 = vmatpush1.msra.mxu0 %v1177
        %1348 = vmatprep.subr.mxu0 %v1182
        %1349 = vmatpush1.msra.mxu0 %v1181
        %1350 = vmatprep.subr.mxu0 %v1186
        %1351 = vmatpush1.msra.mxu0 %v1185
        %1352 = vmatprep.subr.mxu0 %v1190
        %1353 = vmatpush1.msra.mxu0 %v1189
        %1354 = vmatprep.subr.mxu0 %v1194
        %1355 = vmatpush1.msra.mxu0 %v1193
        %1356 = vmatprep.subr.mxu0 %v1198
        %1357 = vmatpush1.msra.mxu0 %v1197
        %1358 = vmatprep.subr.mxu0 %v1202
        %1359 = vmatpush1.msra.mxu0 %v1201
        %1360 = vmatprep.subr.mxu0 %v1206
        %1361 = vmatpush1.msra.mxu0 %v1205
        %1362 = vmatprep.subr.mxu0 %v1210
        %1363 = vmatpush1.msra.mxu0 %v1209
        %1364 = vmatprep.subr.mxu0 %v1214
        %1365 = vmatpush1.msra.mxu0 %v1213
        %1366 = vmatprep.subr.mxu0 %v1218
        %1367 = vmatpush1.msra.mxu0 %v1217
        %1368 = vmatprep.subr.mxu0 %v1222
        %1369 = vmatpush1.msra.mxu0 %v1221
        %1370 = vmatprep.subr.mxu0 %v1226
        %1371 = vmatpush1.msra.mxu0 %v1225
        %1372 = vmatprep.subr.mxu0 %v1230
        %1373 = vmatpush1.msra.mxu0 %v1229
        %1374 = vmatprep.subr.mxu0 %v1234
        %1375 = vmatpush1.msra.mxu0 %v1233
        %1376 = vmatprep.subr.mxu0 %v1238
        %1377 = vmatpush1.msra.mxu0 %v1237
        %1378 = vmatprep.subr.mxu0 %v1242
        %1379 = vmatpush1.msra.mxu0 %v1241
        %1380 = vmatprep.subr.mxu0 %v1246
        %1381 = vmatpush1.msra.mxu0 %v1245
        %1382 = vmatprep.subr.mxu0 %v1250
        %1383 = vmatpush1.msra.mxu0 %v1249
        %1384 = vmatprep.subr.mxu0 %v1254
        %1385 = vmatpush1.msra.mxu0 %v1253
        %1386 = vmatprep.subr.mxu0 0.0
        %1387 = vmatpush1.msra.mxu0 0.0
        %1388 = vmatprep.subr.mxu0 0.0
        %1389 = vmatpush1.msra.mxu0 0.0
        %1390 = vmatprep.subr.mxu0 0.0
        %1391 = vmatpush1.msra.mxu0 0.0
        %1392 = vmatprep.subr.mxu0 0.0
        %1393 = vmatpush1.msra.mxu0 0.0
        %1394 = vmatprep.subr.mxu0 0.0
        %1395 = vmatpush1.msra.mxu0 0.0
        %1396 = vmatprep.subr.mxu0 0.0
        %1397 = vmatpush1.msra.mxu0 0.0
        %1398 = vmatprep.subr.mxu0 0.0
        %1399 = vmatpush1.msra.mxu0 0.0
        %1400 = vmatprep.mubr.f32.mxu0 %v1263
        %1401 = vmatmul.mubr.f32.gmra.mrb[0].mxu0 %v1153
        %v1402 = vpop.f32.mrb[0].mxu0
        %v1403 = vadd.f32 %v1259, %v1402
        %v1404 = vpop.f32.mrb[0].mxu0
        %v1405 = vadd.f32 %v1259, %v1404
        %1406 = vdwg.mxu0
        %vm1407 = vcmp.ge.f32.partialorder %v1332, 0.0
        %vm1408 = vcmp.ge.f32.partialorder %v1334, 0.0
        %vm1409 = vcmp.ge.f32.partialorder %v1403, 0.0
        %vm1410 = vcmp.ge.f32.partialorder %v1405, 0.0
        %v1411 = vmul.f32 %v1332, 0.01
        %v1412 = vmul.f32 %v1334, 0.01
        %v1413 = vmul.f32 %v1403, 0.01
        %v1414 = vmul.f32 %v1405, 0.01
        %v1415 = vsel %vm1407, %v1332, %v1411
        %v1416 = vsel %vm1408, %v1334, %v1412
        %v1417 = vsel %vm1409, %v1403, %v1413
        %v1418 = vsel %vm1410, %v1405, %v1414
        %v1419 = vld [vmem:[#allocation2] sm:$0xff]
        %v1420 = vld [vmem:[#allocation2 + $0x8] sm:$0xff]
        %v1421 = vld [vmem:[#allocation2 + $0x10] sm:$0xff]
        %v1422 = vld [vmem:[#allocation2 + $0x18] sm:$0xff]
        %1427 = vrot.lane.b32.xlu0 %v1415, 42
        %v1428 = vpop.permute.xlu0 %1427
        %1429 = vrot.lane.b32.xlu0 %v1416, 42
        %v1430 = vpop.permute.xlu0 %1429
        %1431 = vrot.lane.b32.xlu0 %v1417, 42
        %v1432 = vpop.permute.xlu0 %1431
        %1433 = vrot.lane.b32.xlu0 %v1418, 42
        %v1434 = vpop.permute.xlu0 %1433
        %vm1435 = vcmask 343040
        %v1436 = vsel %vm1435, %v1428, %v1430
        %v1437 = vsel %vm1435, %v1430, %v1432
        %v1438 = vsel %vm1435, %v1432, %v1434
        %v1443 = vadd.f32 %v1419, %v1428
        %v1444 = vadd.f32 %v1420, %v1436
        %v1445 = vadd.f32 %v1421, %v1437
        %v1446 = vadd.f32 %v1422, %v1438
        %v1447 = vld [vmem:[%s5] sm:$0xff]
        %v1448 = vld [vmem:[%s6] sm:$0xff]
        %1450 = vset.pattern.permute.xlu0 0
        %1451 = vperm.xlu0 %1450, %v1448
        %v1452 = vpop.permute.xlu0 %1451
        %1458 = vrot.lane.b32.xlu0 %v1443, 86
        %v1459 = vpop.permute.xlu0 %1458
        %1460 = vrot.lane.b32.xlu0 %v1444, 86
        %v1461 = vpop.permute.xlu0 %1460
        %1462 = vrot.lane.b32.xlu0 %v1445, 86
        %v1463 = vpop.permute.xlu0 %1462
        %1464 = vrot.lane.b32.xlu0 %v1446, 86
        %v1465 = vpop.permute.xlu0 %1464
        %v1466 = vsel %vm805, %v1459, %v1461
        %v1467 = vsel %vm805, %v1461, %v1463
        %v1468 = vsel %vm805, %v1463, %v1465
        %v1474 = vsel %vm304, %v1447, 0
        %1476 = vmatprep.subr.mxu0 %v1467
        %1477 = vmatpush1.msra.mxu0 %v1466
        %1478 = vmatprep.subr.mxu0 0.0
        %1479 = vmatpush1.msra.mxu0 0.0
        %1480 = vmatprep.subr.mxu0 0.0
        %1481 = vmatpush1.msra.mxu0 0.0
        %1482 = vmatprep.subr.mxu0 0.0
        %1483 = vmatpush1.msra.mxu0 0.0
        %1484 = vmatprep.subr.mxu0 0.0
        %1485 = vmatpush1.msra.mxu0 0.0
        %1486 = vmatprep.subr.mxu0 0.0
        %1487 = vmatpush1.msra.mxu0 0.0
        %1488 = vmatprep.subr.mxu0 0.0
        %1489 = vmatpush1.msra.mxu0 0.0
        %1490 = vmatprep.subr.mxu0 0.0
        %1491 = vmatpush1.msra.mxu0 0.0
        %1492 = vmatprep.subr.mxu0 0.0
        %1493 = vmatpush1.msra.mxu0 0.0
        %1494 = vmatprep.subr.mxu0 0.0
        %1495 = vmatpush1.msra.mxu0 0.0
        %1496 = vmatprep.subr.mxu0 0.0
        %1497 = vmatpush1.msra.mxu0 0.0
        %1498 = vmatprep.subr.mxu0 0.0
        %1499 = vmatpush1.msra.mxu0 0.0
        %1500 = vmatprep.subr.mxu0 0.0
        %1501 = vmatpush1.msra.mxu0 0.0
        %1502 = vmatprep.subr.mxu0 0.0
        %1503 = vmatpush1.msra.mxu0 0.0
        %1504 = vmatprep.subr.mxu0 0.0
        %1505 = vmatpush1.msra.mxu0 0.0
        %1506 = vmatprep.subr.mxu0 0.0
        %1507 = vmatpush1.msra.mxu0 0.0
        %1508 = vmatprep.subr.mxu0 0.0
        %1509 = vmatpush1.msra.mxu0 0.0
        %1510 = vmatprep.subr.mxu0 0.0
        %1511 = vmatpush1.msra.mxu0 0.0
        %1512 = vmatprep.subr.mxu0 0.0
        %1513 = vmatpush1.msra.mxu0 0.0
        %1514 = vmatprep.subr.mxu0 0.0
        %1515 = vmatpush1.msra.mxu0 0.0
        %1516 = vmatprep.subr.mxu0 0.0
        %1517 = vmatpush1.msra.mxu0 0.0
        %1518 = vmatprep.subr.mxu0 0.0
        %1519 = vmatpush1.msra.mxu0 0.0
        %1520 = vmatprep.subr.mxu0 0.0
        %1521 = vmatpush1.msra.mxu0 0.0
        %1522 = vmatprep.subr.mxu0 0.0
        %1523 = vmatpush1.msra.mxu0 0.0
        %1524 = vmatprep.subr.mxu0 0.0
        %1525 = vmatpush1.msra.mxu0 0.0
        %1526 = vmatprep.subr.mxu0 0.0
        %1527 = vmatpush1.msra.mxu0 0.0
        %1528 = vmatprep.subr.mxu0 0.0
        %1529 = vmatpush1.msra.mxu0 0.0
        %1530 = vmatprep.subr.mxu0 0.0
        %1531 = vmatpush1.msra.mxu0 0.0
        %1532 = vmatprep.subr.mxu0 0.0
        %1533 = vmatpush1.msra.mxu0 0.0
        %1534 = vmatprep.subr.mxu0 0.0
        %1535 = vmatpush1.msra.mxu0 0.0
        %1536 = vmatprep.subr.mxu0 0.0
        %1537 = vmatpush1.msra.mxu0 0.0
        %1538 = vmatprep.subr.mxu0 0.0
        %1539 = vmatpush1.msra.mxu0 0.0
        %1540 = vmatprep.mubr.f32.mxu0 0.0
        %1541 = vmatmul.mubr.f32.gmra.mrb[0].mxu0 %v1474
        %v1542 = vpop.f32.mrb[0].mxu0
        %v1543 = vadd.f32 %v1452, %v1542
        %v1544 = vpop.f32.mrb[0].mxu0
        %v1545 = vadd.f32 %v1452, %v1544
        %1546 = vdwg.mxu0
        %1547 = vmatprep.subr.mxu0 %v1465
        %1548 = vmatpush1.msra.mxu0 %v1468
        %1549 = vmatprep.subr.mxu0 0.0
        %1550 = vmatpush1.msra.mxu0 0.0
        %1551 = vmatprep.subr.mxu0 0.0
        %1552 = vmatpush1.msra.mxu0 0.0
        %1553 = vmatprep.subr.mxu0 0.0
        %1554 = vmatpush1.msra.mxu0 0.0
        %1555 = vmatprep.subr.mxu0 0.0
        %1556 = vmatpush1.msra.mxu0 0.0
        %1557 = vmatprep.subr.mxu0 0.0
        %1558 = vmatpush1.msra.mxu0 0.0
        %1559 = vmatprep.subr.mxu0 0.0
        %1560 = vmatpush1.msra.mxu0 0.0
        %1561 = vmatprep.subr.mxu0 0.0
        %1562 = vmatpush1.msra.mxu0 0.0
        %1563 = vmatprep.subr.mxu0 0.0
        %1564 = vmatpush1.msra.mxu0 0.0
        %1565 = vmatprep.subr.mxu0 0.0
        %1566 = vmatpush1.msra.mxu0 0.0
        %1567 = vmatprep.subr.mxu0 0.0
        %1568 = vmatpush1.msra.mxu0 0.0
        %1569 = vmatprep.subr.mxu0 0.0
        %1570 = vmatpush1.msra.mxu0 0.0
        %1571 = vmatprep.subr.mxu0 0.0
        %1572 = vmatpush1.msra.mxu0 0.0
        %1573 = vmatprep.subr.mxu0 0.0
        %1574 = vmatpush1.msra.mxu0 0.0
        %1575 = vmatprep.subr.mxu0 0.0
        %1576 = vmatpush1.msra.mxu0 0.0
        %1577 = vmatprep.subr.mxu0 0.0
        %1578 = vmatpush1.msra.mxu0 0.0
        %1579 = vmatprep.subr.mxu0 0.0
        %1580 = vmatpush1.msra.mxu0 0.0
        %1581 = vmatprep.subr.mxu0 0.0
        %1582 = vmatpush1.msra.mxu0 0.0
        %1583 = vmatprep.subr.mxu0 0.0
        %1584 = vmatpush1.msra.mxu0 0.0
        %1585 = vmatprep.subr.mxu0 0.0
        %1586 = vmatpush1.msra.mxu0 0.0
        %1587 = vmatprep.subr.mxu0 0.0
        %1588 = vmatpush1.msra.mxu0 0.0
        %1589 = vmatprep.subr.mxu0 0.0
        %1590 = vmatpush1.msra.mxu0 0.0
        %1591 = vmatprep.subr.mxu0 0.0
        %1592 = vmatpush1.msra.mxu0 0.0
        %1593 = vmatprep.subr.mxu0 0.0
        %1594 = vmatpush1.msra.mxu0 0.0
        %1595 = vmatprep.subr.mxu0 0.0
        %1596 = vmatpush1.msra.mxu0 0.0
        %1597 = vmatprep.subr.mxu0 0.0
        %1598 = vmatpush1.msra.mxu0 0.0
        %1599 = vmatprep.subr.mxu0 0.0
        %1600 = vmatpush1.msra.mxu0 0.0
        %1601 = vmatprep.subr.mxu0 0.0
        %1602 = vmatpush1.msra.mxu0 0.0
        %1603 = vmatprep.subr.mxu0 0.0
        %1604 = vmatpush1.msra.mxu0 0.0
        %1605 = vmatprep.subr.mxu0 0.0
        %1606 = vmatpush1.msra.mxu0 0.0
        %1607 = vmatprep.subr.mxu0 0.0
        %1608 = vmatpush1.msra.mxu0 0.0
        %1609 = vmatprep.subr.mxu0 0.0
        %1610 = vmatpush1.msra.mxu0 0.0
        %1611 = vmatprep.mubr.f32.mxu0 0.0
        %1612 = vmatmul.mubr.f32.gmra.mrb[0].mxu0 %v1474
        %v1613 = vpop.f32.mrb[0].mxu0
        %v1614 = vadd.f32 %v1452, %v1613
        %v1615 = vpop.f32.mrb[0].mxu0
        %1616 = vdwg.mxu0
        %vm1617 = vcmp.ge.f32.partialorder %v1543, 0.0
        %vm1618 = vcmp.ge.f32.partialorder %v1545, 0.0
        %vm1619 = vcmp.ge.f32.partialorder %v1614, 0.0
        %v1620 = vmul.f32 %v1543, 0.01
        %v1621 = vmul.f32 %v1545, 0.01
        %v1622 = vmul.f32 %v1614, 0.01
        %v1623 = vsel %vm1617, %v1543, %v1620
        %v1624 = vsel %vm1618, %v1545, %v1621
        %v1625 = vsel %vm1619, %v1614, %v1622
        %1627 = vrot.lane.b32.xlu0 %v1623, 86
        %v1628 = vpop.permute.xlu0 %1627
        %v1630 = vadd.f32 %v295, %v1628
        %1631 = vst.msk [vmem:[%s294] sm:$0xff] %vm471, %v1630
        %1632 = vrot.lane.b32.xlu0 %v1623, 82
        %v1633 = vpop.permute.xlu0 %1632
        %v1635 = vadd.f32 %v295, %v1633
        %1636 = vst.msk [vmem:[%s294] sm:$0xff] %vm411, %v1635
        %1637 = vrot.lane.b32.xlu0 %v1623, 78
        %v1638 = vpop.permute.xlu0 %1637
        %v1640 = vadd.f32 %v295, %v1638
        %vm1641 = vcmask 392448
        %1642 = vst.msk [vmem:[%s294] sm:$0xff] %vm1641, %v1640
        %1643 = vrot.lane.b32.xlu0 %v1623, 74
        %v1644 = vpop.permute.xlu0 %1643
        %v1646 = vadd.f32 %v295, %v1644
        %1647 = vst.msk [vmem:[%s294] sm:$0xff] %vm451, %v1646
        %1649 = vrot.lane.b32.xlu0 %v1623, 70
        %v1650 = vpop.permute.xlu0 %1649
        %1651 = vrot.lane.b32.xlu0 %v1624, 70
        %v1652 = vpop.permute.xlu0 %1651
        %vm1653 = vcmask 572416
        %v1654 = vsel %vm1653, %v1650, %v1652
        %v1656 = vadd.f32 %v295, %v1654
        %vm1657 = vcmask 654848
        %1658 = vst.msk [vmem:[%s294] sm:$0xff] %vm1657, %v1656
        %1659 = vrot.lane.b32.xlu0 %v1624, 66
        %v1660 = vpop.permute.xlu0 %1659
        %v1662 = vadd.f32 %v295, %v1660
        %vm1663 = vcmask 786048
        %1664 = vst.msk [vmem:[%s294] sm:$0xff] %vm1663, %v1662
        %1665 = vrot.lane.b32.xlu0 %v1624, 62
        %v1666 = vpop.permute.xlu0 %1665
        %v1668 = vadd.f32 %v295, %v1666
        %1669 = vst.msk [vmem:[%s294] sm:$0xff] %vm431, %v1668
        %1670 = vrot.lane.b32.xlu0 %v1624, 58
        %v1671 = vpop.permute.xlu0 %1670
        %v1673 = vadd.f32 %v295, %v1671
        %vm1674 = vcmask 1048448
        %1675 = vst.msk [vmem:[%s294] sm:$0xff] %vm1674, %v1673
        %1676 = vrot.lane.b32.xlu0 %v1624, 54
        %v1677 = vpop.permute.xlu0 %1676
        %v1679 = vadd.f32 %v296, %v1677
        %1680 = vst.msk [vmem:[%s294 + $0x8] sm:$0xff] %vm471, %v1679
        %1681 = vrot.lane.b32.xlu0 %v1624, 50
        %v1682 = vpop.permute.xlu0 %1681
        %v1684 = vadd.f32 %v296, %v1682
        %1685 = vst.msk [vmem:[%s294 + $0x8] sm:$0xff] %vm411, %v1684
        %1687 = vrot.lane.b32.xlu0 %v1624, 46
        %v1688 = vpop.permute.xlu0 %1687
        %1689 = vrot.lane.b32.xlu0 %v1625, 46
        %v1690 = vpop.permute.xlu0 %1689
        %v1691 = vsel %vm1085, %v1688, %v1690
        %v1693 = vadd.f32 %v296, %v1691
        %1694 = vst.msk [vmem:[%s294 + $0x8] sm:$0xff] %vm1641, %v1693
        %1695 = vrot.lane.b32.xlu0 %v1625, 42
        %v1696 = vpop.permute.xlu0 %1695
        %v1698 = vadd.f32 %v296, %v1696
        %1699 = vst.msk [vmem:[%s294 + $0x8] sm:$0xff] %vm451, %v1698
        %1700 = vrot.lane.b32.xlu0 %v1625, 38
        %v1701 = vpop.permute.xlu0 %1700
        %v1703 = vadd.f32 %v296, %v1701
        %1704 = vst.msk [vmem:[%s294 + $0x8] sm:$0xff] %vm1657, %v1703
        %1705 = vrot.lane.b32.xlu0 %v1625, 34
        %v1706 = vpop.permute.xlu0 %1705
        %v1708 = vadd.f32 %v296, %v1706
        %1709 = vst.msk [vmem:[%s294 + $0x8] sm:$0xff] %vm1663, %v1708
        %1710 = vrot.lane.b32.xlu0 %v1625, 30
        %v1711 = vpop.permute.xlu0 %1710
        %v1713 = vadd.f32 %v296, %v1711
        %1714 = vst.msk [vmem:[%s294 + $0x8] sm:$0xff] %vm431, %v1713
        %1715 = vrot.lane.b32.xlu0 %v1625, 26
        %v1716 = vpop.permute.xlu0 %1715
        %v1718 = vadd.f32 %v296, %v1716
        %1719 = vst.msk [vmem:[%s294 + $0x8] sm:$0xff] %vm1674, %v1718
        %s1720 = sand.u32 %s184, 1
        %s1721 = scalar_lea.sflag [#allocation6], %s1720
        %s1722 = sand.u32 %s184, 1
        %s1723 = smul.addr %s1722, 16
        %s1724 = scalar_lea.vmem [#allocation7], %s1723
        // Predicated region
        $region53: #{tpu_custom_call.1} parent=47 // pred_check
          %p1725 = pneg %p194
        $region54: #{tpu_custom_call.1} parent=47 // pred_check_branch
          %1727 = sbr.rel (%p1725) target = $region56
        $region55: #{tpu_custom_call.1} parent=47 // pred_region
          %s1729 = ssub.s32 256, 256
          %1730 = vsyncadd %s1721, %s1729
          %s1731 = smul.addr %s24, 2
          %s1732 = smul.addr %s1731, 128
          %s1733 = scalar_lea.hbm %s7, %s1732
          %s1735 = sshll.u32 %s1724, 4
          %s1736 = int_to_ptr.vmem [resolvable:$true] %s1735
          %1738 = dma.vmem_to_hbm [thread:$0]  %s1736, 256, %s1733, %s1721
        $region56: #{tpu_custom_call.1} parent=47 // pred_fallthru
          _
      $region48: #{tpu_custom_call.1} parent=5 // pred_fallthru
        _
      %p1739 = scmp.le.s32.totalorder 2, %s19
      // Predicated region
      $region57: #{tpu_custom_call.1} parent=5 // pred_check
        %p1740 = pneg %p1739
      $region58: #{tpu_custom_call.1} parent=5 // pred_check_branch
        %1742 = sbr.rel (%p1740) target = $region60
      $region59: #{tpu_custom_call.1} parent=5 // pred_region
        %s1743 = ssub.s32 %s19, 2
        // Predicated region
        $region61: #{tpu_custom_call.1} parent=59 // pred_check
          %p1744 = pneg %p200
        $region62: #{tpu_custom_call.1} parent=59 // pred_check_branch
          %1746 = sbr.rel (%p1744) target = $region64
        $region63: #{tpu_custom_call.1} parent=59 // pred_region
          %s1747 = sand.u32 %s185, 1
          %s1748 = scalar_lea.sflag [#allocation6], %s1747
          %s1749 = sand.u32 %s185, 1
          %s1750 = smul.addr %s1749, 16
          %s1751 = scalar_lea.vmem [#allocation7], %s1750
          %1752 = dma.done %s1748, 256
        $region64: #{tpu_custom_call.1} parent=59 // pred_fallthru
          _
      $region60: #{tpu_custom_call.1} parent=5 // pred_fallthru
        _
    $region6: #{tpu_custom_call.1} parent=1 // loop_footer
      %s23 = sadd.s32 1, %s19
    $region7: #{tpu_custom_call.1} parent=1 // loop_footer_branch
      %18 = sbr.rel target = $region3
    $region8: #{tpu_custom_call.1} parent=1 // loop_exit
      _
    %1753 = vsyncpa [#allocation5], 1
    %s1754 = scalar_lea.sflag [#allocation5], 1
    %1755 = vsyncpa %s1754, 1
    %1756 = vsyncpa [#allocation6], 1
    %s1757 = scalar_lea.sflag [#allocation6], 1
    %1758 = vsyncpa %s1757, 1

</llo_original>
